<compile_context>
chip_gen: v5e
topology: v5e:2x2
jax: 0.10.0
libtpu: 0.0.40
codegen_flags: <defaults>
</compile_context>

<pallas_src>
import jax
import jax.numpy as jnp
from jax.experimental import pallas as pl
from jax.experimental.pallas import tpu as pltpu


def _tbh_to_bth(x):
    """One block-level (time, batch) axis swap, lane dim unchanged."""
    if hasattr(pltpu, "einshape"):
        return pltpu.einshape("tbh->bth", x)
    return jnp.transpose(x, (1, 0, 2))


def _lstm_attn_kernel(
    # inputs
    g_ref,         # (T_BLK, B_TILE, 4H)  f32  precomputed x @ Wi + (bi + bh), time-major
    h0_ref,        # (B_TILE, H)          f32
    c0_ref,        # (B_TILE, H)          f32
    ctx_ref,       # (B_TILE, L, H)       compute dtype (bf16/f32)
    ctxT_ref,      # (B_TILE, H, L)       compute dtype, ctx pre-transposed (for scores)
    wh_ref,        # (H, 4H)              compute dtype
    wattn_ref,     # (H, H)               compute dtype  SoftDotAttention.linear_in
    woutc_ref,     # (H, H)               compute dtype  linear_out rows for weighted ctx
    wouth_ref,     # (H, H)               compute dtype  linear_out rows for h
    # outputs
    h_out_ref,     # (B_TILE, T_BLK, H)   f32  raw LSTM hidden states (batch-major)
    ht_out_ref,    # (B_TILE, T_BLK, H)   f32  h_tilde
    c_out_ref,     # (B_TILE, T_BLK, H)   f32  weighted context
    attn_out_ref,  # (B_TILE, T_BLK, L)   f32  attention weights
    hfin_ref,      # (B_TILE, H)          f32  final hidden state; cross-block carry
    cfin_ref,      # (B_TILE, H)          f32  final cell  state; cross-block carry
    # scratch
    h_tm_ref,      # (T_BLK, B_TILE, H)   f32  time-major hidden scratch
):
    t_blk, b_tile, _ = g_ref.shape
    H = h0_ref.shape[-1]
    L = ctx_ref.shape[1]
    cdt = wh_ref.dtype   # matmul operand dtype (bf16 in production, f32 optional)

    # First time-block of each batch tile: seed the VMEM-resident carry from (h0, c0).
    @pl.when(pl.program_id(1) == 0)
    def _():
        hfin_ref[...] = h0_ref[...]
        cfin_ref[...] = c0_ref[...]

    wh = wh_ref[...]
    hx = hfin_ref[...]          # f32 state
    cx = cfin_ref[...]          # f32 state

    # ---- sequential LSTM recurrence over the time block (static unroll, t_blk <= 32) ----
    # Per-step stores go to the leading axis of the time-major scratch (contiguous).
    for i in range(t_blk):
        gates = g_ref[i] + jnp.dot(hx.astype(cdt), wh,
                                   preferred_element_type=jnp.float32)   # (B_TILE, 4H) f32
        ingate = jax.nn.sigmoid(gates[:, 0:H])
        forgetgate = jax.nn.sigmoid(gates[:, H:2 * H])
        cellgate = jnp.tanh(gates[:, 2 * H:3 * H])
        outgate = jax.nn.sigmoid(gates[:, 3 * H:4 * H])
        cx = forgetgate * cx + ingate * cellgate
        hx = outgate * jnp.tanh(cx)
        h_tm_ref[i] = hx

    # Carry to the next time block (and final-state output); one store per block.
    hfin_ref[...] = hx
    cfin_ref[...] = cx

    # ---- one transpose to batch-major; h_out written as a single slab ----
    h_bm = _tbh_to_bth(h_tm_ref[...])                 # (B_TILE, T_BLK, H) f32
    h_out_ref[...] = h_bm

    # ---- block-level attention epilogue ----
    M = b_tile * t_blk
    h_flat = h_bm.reshape(M, H).astype(cdt)           # rows ordered (b, t)

    # Hoisted weight matmuls: single large-M MXU calls for the whole block.
    tgt = jnp.dot(h_flat, wattn_ref[...],
                  preferred_element_type=jnp.float32)          # (M, H)
    houth = jnp.dot(h_flat, wouth_ref[...],
                    preferred_element_type=jnp.float32)        # (M, H)

    # scores: intrinsically per-batch (different ctx per row); ctx comes pre-transposed.
    tgt_c = tgt.astype(cdt)
    scores = jnp.concatenate(
        [jnp.dot(tgt_c[b * t_blk:(b + 1) * t_blk, :], ctxT_ref[b],
                 preferred_element_type=jnp.float32)
         for b in range(b_tile)],
        axis=0)                                                # (M, L) f32

    # Block-level softmax (one VPU/EUP/XLU pass for the whole block).
    m = jnp.max(scores, axis=-1, keepdims=True)
    e = jnp.exp(scores - m)
    denom = jnp.sum(e, axis=-1, keepdims=True)
    attn = e * pl.reciprocal(denom, approx=True)               # (M, L) f32

    # weighted context: per-batch attn_b @ ctx_b.
    attn_c = attn.astype(cdt)
    wctx = jnp.concatenate(
        [jnp.dot(attn_c[b * t_blk:(b + 1) * t_blk, :], ctx_ref[b],
                 preferred_element_type=jnp.float32)
         for b in range(b_tile)],
        axis=0)                                                # (M, H) f32

    # h_tilde for the whole block: one matmul + one tanh.
    h_tilde = jnp.tanh(
        jnp.dot(wctx.astype(cdt), woutc_ref[...], preferred_element_type=jnp.float32)
        + houth)                                               # (M, H) f32

    # Full-block slab stores.
    ht_out_ref[...] = h_tilde.reshape(b_tile, t_blk, H)
    c_out_ref[...] = wctx.reshape(b_tile, t_blk, H)
    attn_out_ref[...] = attn.reshape(b_tile, t_blk, L)


def _pick_time_block(T, max_blk=32):
    """Largest divisor of T <= max_blk that is sublane-friendly (multiple of 8) or equal
    to T; falls back to a single time block (always layout-legal)."""
    for cand in range(min(T, max_blk), 0, -1):
        if T % cand == 0 and (cand % 8 == 0 or cand == T):
            return cand
    return T


def lstm_attention_forward(x, hidden, ctx, params, *, t_blk=None, b_tile=None,
                           matmul_dtype=jnp.bfloat16, vmem_limit_bytes=None):
    """x: (B, T, D_in); hidden = (h0, c0) each (B, H); ctx: (B, L, H).

    Returns (h_out, h_tilde_out, c_out, attn_out, cov_out, (h_T, c_T)) — batch-first,
    matching the PyTorch LSTMAttention(attn_type='soft', coverage=False) forward.
    """
    h0, c0 = hidden
    B, T, D_in = x.shape
    H = h0.shape[-1]
    L = ctx.shape[1]

    if t_blk is None:
        t_blk = _pick_time_block(T)
    assert T % t_blk == 0
    if b_tile is None:
        b_tile = B
    assert B % b_tile == 0
    # (8,128) layout rule for the (b_tile, H)-shaped state blocks.
    assert b_tile == B or b_tile % 8 == 0

    wi, bi, wh, bh = params["wi"], params["bi"], params["wh"], params["bh"]
    wattn, wout = params["wattn"], params["wout"]
    wout_c, wout_h = wout[:H, :], wout[H:, :]          # split linear_out outside

    # Hoisted input projection: one (B*T, D_in) @ (D_in, 4H) MXU matmul in XLA with the
    # two biases pre-summed; fed to the kernel time-major as (T, B, 4H), kept in f32 so
    # gate pre-activations stay accurate.
    g = (jnp.einsum('btd,dg->tbg', x, wi)
         + (bi + bh).reshape(1, 1, 4 * H)).astype(jnp.float32)       # (T, B, 4H)

    # Matmul operands in the compute dtype (bf16 by default): halves weight/ctx DMA and
    # VMEM residency and hits the MXU native bf16 rate. State / accumulation stay f32.
    cdt = matmul_dtype
    wh_c = wh.astype(cdt)
    wattn_c = wattn.astype(cdt)
    woutc_c = wout_c.astype(cdt)
    wouth_c = wout_h.astype(cdt)
    ctx_c = ctx.astype(cdt)                                   # (B, L, H) for attn @ ctx
    ctx_t = jnp.transpose(ctx, (0, 2, 1)).astype(cdt)         # (B, H, L) for scores

    out_shapes = (
        jax.ShapeDtypeStruct((B, T, H), jnp.float32),   # h_out (batch-major, no wrapper transpose)
        jax.ShapeDtypeStruct((B, T, H), jnp.float32),   # h_tilde_out
        jax.ShapeDtypeStruct((B, T, H), jnp.float32),   # c_out (weighted ctx)
        jax.ShapeDtypeStruct((B, T, L), jnp.float32),   # attn_out
        jax.ShapeDtypeStruct((B, H), jnp.float32),      # h_T
        jax.ShapeDtypeStruct((B, H), jnp.float32),      # c_T
    )

    grid = (B // b_tile, T // t_blk)   # (parallel batch tiles, sequential time blocks)

    grid_spec = pltpu.PrefetchScalarGridSpec(
        num_scalar_prefetch=0,
        grid=grid,
        in_specs=[
            pl.BlockSpec((t_blk, b_tile, 4 * H), lambda b, t: (t, b, 0)),   # g
            pl.BlockSpec((b_tile, H), lambda b, t: (b, 0)),                 # h0
            pl.BlockSpec((b_tile, H), lambda b, t: (b, 0)),                 # c0
            pl.BlockSpec((b_tile, L, H), lambda b, t: (b, 0, 0)),           # ctx
            pl.BlockSpec((b_tile, H, L), lambda b, t: (b, 0, 0)),           # ctx^T
            pl.BlockSpec((H, 4 * H), lambda b, t: (0, 0)),                  # wh
            pl.BlockSpec((H, H), lambda b, t: (0, 0)),                      # wattn
            pl.BlockSpec((H, H), lambda b, t: (0, 0)),                      # wout_c
            pl.BlockSpec((H, H), lambda b, t: (0, 0)),                      # wout_h
        ],
        out_specs=[
            pl.BlockSpec((b_tile, t_blk, H), lambda b, t: (b, t, 0)),       # h_out
            pl.BlockSpec((b_tile, t_blk, H), lambda b, t: (b, t, 0)),       # h_tilde_out
            pl.BlockSpec((b_tile, t_blk, H), lambda b, t: (b, t, 0)),       # c_out
            pl.BlockSpec((b_tile, t_blk, L), lambda b, t: (b, t, 0)),       # attn_out
            pl.BlockSpec((b_tile, H), lambda b, t: (b, 0)),                 # h_T (carry)
            pl.BlockSpec((b_tile, H), lambda b, t: (b, 0)),                 # c_T (carry)
        ],
        scratch_shapes=[pltpu.VMEM((t_blk, b_tile, H), jnp.float32)],       # time-major h
    )

    h_out, ht_out, c_out, attn_out, h_fin, c_fin = pl.pallas_call(
        _lstm_attn_kernel,
        out_shape=out_shapes,
        grid_spec=grid_spec,
        compiler_params=pltpu.CompilerParams(
            # batch tiles are independent (megacore-parallel); the time axis carries the
            # recurrence through hfin/cfin and MUST stay sequential ("arbitrary").
            dimension_semantics=("parallel", "arbitrary"),
            vmem_limit_bytes=vmem_limit_bytes),
    )(g, h0, c0, ctx_c, ctx_t, wh_c, wattn_c, woutc_c, wouth_c)

    cov_out = ()  # coverage=False -> empty, mirrors the PyTorch empty list
    return h_out, ht_out, c_out, attn_out, cov_out, (h_fin, c_fin)


def _reference_forward(x, hidden, ctx, params):
    """Pure-JAX reference of the same forward (for validation)."""
    hx, cx = hidden
    B, T, _ = x.shape
    H = hx.shape[-1]
    hs, hts, cs, attns = [], [], [], []
    for t in range(T):
        x_t = x[:, t, :]
        gates = x_t @ params["wi"] + params["bi"] + hx @ params["wh"] + params["bh"]
        i = jax.nn.sigmoid(gates[:, 0:H])
        f = jax.nn.sigmoid(gates[:, H:2 * H])
        g = jnp.tanh(gates[:, 2 * H:3 * H])
        o = jax.nn.sigmoid(gates[:, 3 * H:4 * H])
        cx = f * cx + i * g
        hx = o * jnp.tanh(cx)
        target = hx @ params["wattn"]
        scores = jnp.einsum("blh,bh->bl", ctx, target)
        attn = jax.nn.softmax(scores, axis=1)
        wctx = jnp.einsum("bl,blh->bh", attn, ctx)
        h_tilde = jnp.tanh(jnp.concatenate([wctx, hx], axis=1) @ params["wout"])
        hs.append(hx); hts.append(h_tilde); cs.append(wctx); attns.append(attn)
    stack = lambda xs: jnp.stack(xs, axis=1)
    return stack(hs), stack(hts), stack(cs), stack(attns), (), (hx, cx)


if __name__ == "__main__":
    key = jax.random.PRNGKey(0)
    B, T, D_in, H, L = 2, 8, 16, 32, 8

    keys = jax.random.split(key, 12)
    scale = 0.1
    params = {
        "wi": scale * jax.random.normal(keys[0], (D_in, 4 * H), jnp.float32),
        "bi": scale * jax.random.normal(keys[1], (1, 4 * H), jnp.float32),
        "wh": scale * jax.random.normal(keys[2], (H, 4 * H), jnp.float32),
        "bh": scale * jax.random.normal(keys[3], (1, 4 * H), jnp.float32),
        "wattn": scale * jax.random.normal(keys[4], (H, H), jnp.float32),
        "wout": scale * jax.random.normal(keys[5], (2 * H, H), jnp.float32),
    }

    x = jax.random.normal(keys[6], (B, T, D_in), jnp.float32)
    h0 = jax.random.normal(keys[7], (B, H), jnp.float32)
    c0 = jax.random.normal(keys[8], (B, H), jnp.float32)
    ctx = jax.random.normal(keys[9], (B, L, H), jnp.float32)

    ref = _reference_forward(x, (h0, c0), ctx, params)

    # ---- f32 matmul path: validates the restructured kernel at tight tolerance ----
    outs32 = lstm_attention_forward(x, (h0, c0), ctx, params, matmul_dtype=jnp.float32)
    outs32 = jax.block_until_ready(outs32)
    h_out, ht_out, c_out, attn_out, cov_out, (h_fin, c_fin) = outs32

    # LSTM-state path (no approximate ops in f32 mode): tight tolerance.
    for got, want in ((h_out, ref[0]), (h_fin, ref[5][0]), (c_fin, ref[5][1])):
        assert got.shape == want.shape
        assert jnp.allclose(got, want, atol=1e-5, rtol=1e-5), "f32 LSTM-state mismatch"
    # Attention path goes through pl.reciprocal(approx=True) (~2^-12 relative error in
    # the softmax normalizer): correspondingly looser tolerance.
    for got, want in ((ht_out, ref[1]), (c_out, ref[2]), (attn_out, ref[3])):
        assert got.shape == want.shape
        assert jnp.allclose(got, want, atol=2e-3, rtol=2e-3), "f32 attention-path mismatch"

    # ---- bf16 matmul path (production default): bf16 operand rounding (~2^-8 relative)
    #      accumulated over the 8-step recurrence + approx reciprocal -> loose tolerance.
    outs16 = lstm_attention_forward(x, (h0, c0), ctx, params)  # matmul_dtype=bfloat16
    outs16 = jax.block_until_ready(outs16)
    names = ("h_out", "h_tilde_out", "c_out", "attn_out")
    for name, got, want in zip(names, outs16[:4], ref[:4]):
        assert got.shape == want.shape
        assert jnp.allclose(got, want, atol=3e-2, rtol=3e-2), f"bf16 {name} mismatch"
    for name, got, want in zip(("h_T", "c_T"), outs16[5], ref[5]):
        assert got.shape == want.shape
        assert jnp.allclose(got, want, atol=3e-2, rtol=3e-2), f"bf16 {name} mismatch"

    print("KERNEL_OK")
</pallas_src>

<mosaic_0001>
module attributes {stable_mosaic.version = 11 : i64} {
  func.func @_lstm_attn_kernel(%arg0: i32, %arg1: i32, %arg2: memref<8x2x128xf32, #tpu.memory_space<vmem>>, %arg3: memref<2x32xf32, #tpu.memory_space<vmem>>, %arg4: memref<2x32xf32, #tpu.memory_space<vmem>>, %arg5: memref<2x8x32xf32, #tpu.memory_space<vmem>>, %arg6: memref<2x32x8xf32, #tpu.memory_space<vmem>>, %arg7: memref<32x128xf32, #tpu.memory_space<vmem>>, %arg8: memref<32x32xf32, #tpu.memory_space<vmem>>, %arg9: memref<32x32xf32, #tpu.memory_space<vmem>>, %arg10: memref<32x32xf32, #tpu.memory_space<vmem>>, %arg11: memref<2x8x32xf32, #tpu.memory_space<vmem>>, %arg12: memref<2x8x32xf32, #tpu.memory_space<vmem>>, %arg13: memref<2x8x32xf32, #tpu.memory_space<vmem>>, %arg14: memref<2x8x8xf32, #tpu.memory_space<vmem>>, %arg15: memref<2x32xf32, #tpu.memory_space<vmem>>, %arg16: memref<2x32xf32, #tpu.memory_space<vmem>>, %arg17: memref<8x2x32xf32, #tpu.memory_space<vmem>>) attributes {dimension_semantics = [#tpu.dimension_semantics<parallel>, #tpu.dimension_semantics<arbitrary>], iteration_bounds = array<i64: 1, 1>, scalar_prefetch = 0 : i64, scratch_operands = 1 : i64, tpu.core_type = #tpu.core_type<tc>, window_params = [{transform_indices = @transform_0, window_bounds = array<i64: 8, 2, 128>}, {transform_indices = @transform_1, window_bounds = array<i64: 2, 32>}, {transform_indices = @transform_2, window_bounds = array<i64: 2, 32>}, {transform_indices = @transform_3, window_bounds = array<i64: 2, 8, 32>}, {transform_indices = @transform_4, window_bounds = array<i64: 2, 32, 8>}, {pipeline_mode = #tpu.pipeline_mode<synchronous>, transform_indices = @transform_5, window_bounds = array<i64: 32, 128>}, {pipeline_mode = #tpu.pipeline_mode<synchronous>, transform_indices = @transform_6, window_bounds = array<i64: 32, 32>}, {pipeline_mode = #tpu.pipeline_mode<synchronous>, transform_indices = @transform_7, window_bounds = array<i64: 32, 32>}, {pipeline_mode = #tpu.pipeline_mode<synchronous>, transform_indices = @transform_8, window_bounds = array<i64: 32, 32>}, {transform_indices = @transform_9, window_bounds = array<i64: 2, 8, 32>}, {transform_indices = @transform_10, window_bounds = array<i64: 2, 8, 32>}, {transform_indices = @transform_11, window_bounds = array<i64: 2, 8, 32>}, {transform_indices = @transform_12, window_bounds = array<i64: 2, 8, 8>}, {transform_indices = @transform_13, window_bounds = array<i64: 2, 32>}, {transform_indices = @transform_14, window_bounds = array<i64: 2, 32>}]} {
    %c0_i32 = arith.constant 0 : i32
    %0 = arith.cmpi eq, %arg1, %c0_i32 : i32
    %1 = arith.extui %0 : i1 to i32
    %c0_i32_0 = arith.constant 0 : i32
    %2 = arith.cmpi ne, %1, %c0_i32_0 : i32
    scf.if %2 {
      %c0_124 = arith.constant 0 : index
      %c0_125 = arith.constant 0 : index
      %310 = vector.load %arg3[%c0_124, %c0_125] : memref<2x32xf32, #tpu.memory_space<vmem>>, vector<2x32xf32>
      %c0_126 = arith.constant 0 : index
      %c0_127 = arith.constant 0 : index
      %311 = vector.load %arg15[%c0_126, %c0_127] : memref<2x32xf32, #tpu.memory_space<vmem>>, vector<2x32xf32>
      tpu.vector_store %arg15[%c0_126, %c0_127], %310 {strides = array<i32>} : memref<2x32xf32, #tpu.memory_space<vmem>>, vector<2x32xf32>,
      %c0_128 = arith.constant 0 : index
      %c0_129 = arith.constant 0 : index
      %312 = vector.load %arg4[%c0_128, %c0_129] : memref<2x32xf32, #tpu.memory_space<vmem>>, vector<2x32xf32>
      %c0_130 = arith.constant 0 : index
      %c0_131 = arith.constant 0 : index
      %313 = vector.load %arg16[%c0_130, %c0_131] : memref<2x32xf32, #tpu.memory_space<vmem>>, vector<2x32xf32>
      tpu.vector_store %arg16[%c0_130, %c0_131], %312 {strides = array<i32>} : memref<2x32xf32, #tpu.memory_space<vmem>>, vector<2x32xf32>,
    } else {
    }
    %c0 = arith.constant 0 : index
    %c0_1 = arith.constant 0 : index
    %3 = vector.load %arg7[%c0, %c0_1] : memref<32x128xf32, #tpu.memory_space<vmem>>, vector<32x128xf32>
    %c0_2 = arith.constant 0 : index
    %c0_3 = arith.constant 0 : index
    %4 = vector.load %arg15[%c0_2, %c0_3] : memref<2x32xf32, #tpu.memory_space<vmem>>, vector<2x32xf32>
    %c0_4 = arith.constant 0 : index
    %c0_5 = arith.constant 0 : index
    %5 = vector.load %arg16[%c0_4, %c0_5] : memref<2x32xf32, #tpu.memory_space<vmem>>, vector<2x32xf32>
    %c0_6 = arith.constant 0 : index
    %c0_7 = arith.constant 0 : index
    %c0_8 = arith.constant 0 : index
    %6 = vector.load %arg2[%c0_6, %c0_7, %c0_8] : memref<8x2x128xf32, #tpu.memory_space<vmem>>, vector<1x2x128xf32>
    %7 = vector.shape_cast %6 : vector<1x2x128xf32> to vector<2x128xf32>
    %cst = arith.constant dense<0.000000e+00> : vector<2x128xf32>
    %8 = tpu.matmul %4, %3, %cst {dimension_numbers = #tpu.dot_dimension_numbers<[1], [0], [0], [1], [0, 0, 1, 1], [], []>} : vector<2x32xf32>, vector<32x128xf32>, vector<2x128xf32> -> vector<2x128xf32>
    %9 = arith.addf %7, %8 : vector<2x128xf32>
    %10 = vector.extract_strided_slice %9 {offsets = [0, 0], sizes = [2, 32], strides = [1, 1]} : vector<2x128xf32> to vector<2x32xf32>
    %11 = arith.negf %10 : vector<2x32xf32>
    %12 = math.exp %11 : vector<2x32xf32>
    %cst_9 = arith.constant 1.000000e+00 : f32
    %13 = vector.broadcast %cst_9 : f32 to vector<2x32xf32>
    %14 = arith.addf %13, %12 : vector<2x32xf32>
    %15 = arith.divf %13, %14 : vector<2x32xf32>
    %16 = vector.extract_strided_slice %9 {offsets = [0, 32], sizes = [2, 32], strides = [1, 1]} : vector<2x128xf32> to vector<2x32xf32>
    %17 = arith.negf %16 : vector<2x32xf32>
    %18 = math.exp %17 : vector<2x32xf32>
    %cst_10 = arith.constant 1.000000e+00 : f32
    %19 = vector.broadcast %cst_10 : f32 to vector<2x32xf32>
    %20 = arith.addf %19, %18 : vector<2x32xf32>
    %21 = arith.divf %19, %20 : vector<2x32xf32>
    %22 = vector.extract_strided_slice %9 {offsets = [0, 64], sizes = [2, 32], strides = [1, 1]} : vector<2x128xf32> to vector<2x32xf32>
    %23 = math.tanh %22 : vector<2x32xf32>
    %24 = vector.extract_strided_slice %9 {offsets = [0, 96], sizes = [2, 32], strides = [1, 1]} : vector<2x128xf32> to vector<2x32xf32>
    %25 = arith.negf %24 : vector<2x32xf32>
    %26 = math.exp %25 : vector<2x32xf32>
    %cst_11 = arith.constant 1.000000e+00 : f32
    %27 = vector.broadcast %cst_11 : f32 to vector<2x32xf32>
    %28 = arith.addf %27, %26 : vector<2x32xf32>
    %29 = arith.divf %27, %28 : vector<2x32xf32>
    %30 = arith.mulf %21, %5 : vector<2x32xf32>
    %31 = arith.mulf %15, %23 : vector<2x32xf32>
    %32 = arith.addf %30, %31 : vector<2x32xf32>
    %33 = math.tanh %32 : vector<2x32xf32>
    %34 = arith.mulf %29, %33 : vector<2x32xf32>
    %c0_12 = arith.constant 0 : index
    %c0_13 = arith.constant 0 : index
    %c0_14 = arith.constant 0 : index
    %35 = vector.load %arg17[%c0_12, %c0_13, %c0_14] : memref<8x2x32xf32, #tpu.memory_space<vmem>>, vector<1x2x32xf32>
    %36 = vector.shape_cast %35 : vector<1x2x32xf32> to vector<2x32xf32>
    %37 = vector.shape_cast %34 : vector<2x32xf32> to vector<1x2x32xf32>
    tpu.vector_store %arg17[%c0_12, %c0_13, %c0_14], %37 {strides = array<i32>} : memref<8x2x32xf32, #tpu.memory_space<vmem>>, vector<1x2x32xf32>,
    %c1 = arith.constant 1 : index
    %c0_15 = arith.constant 0 : index
    %c0_16 = arith.constant 0 : index
    %38 = vector.load %arg2[%c1, %c0_15, %c0_16] : memref<8x2x128xf32, #tpu.memory_space<vmem>>, vector<1x2x128xf32>
    %39 = vector.shape_cast %38 : vector<1x2x128xf32> to vector<2x128xf32>
    %cst_17 = arith.constant dense<0.000000e+00> : vector<2x128xf32>
    %40 = tpu.matmul %34, %3, %cst_17 {dimension_numbers = #tpu.dot_dimension_numbers<[1], [0], [0], [1], [0, 0, 1, 1], [], []>} : vector<2x32xf32>, vector<32x128xf32>, vector<2x128xf32> -> vector<2x128xf32>
    %41 = arith.addf %39, %40 : vector<2x128xf32>
    %42 = vector.extract_strided_slice %41 {offsets = [0, 0], sizes = [2, 32], strides = [1, 1]} : vector<2x128xf32> to vector<2x32xf32>
    %43 = arith.negf %42 : vector<2x32xf32>
    %44 = math.exp %43 : vector<2x32xf32>
    %cst_18 = arith.constant 1.000000e+00 : f32
    %45 = vector.broadcast %cst_18 : f32 to vector<2x32xf32>
    %46 = arith.addf %45, %44 : vector<2x32xf32>
    %47 = arith.divf %45, %46 : vector<2x32xf32>
    %48 = vector.extract_strided_slice %41 {offsets = [0, 32], sizes = [2, 32], strides = [1, 1]} : vector<2x128xf32> to vector<2x32xf32>
    %49 = arith.negf %48 : vector<2x32xf32>
    %50 = math.exp %49 : vector<2x32xf32>
    %cst_19 = arith.constant 1.000000e+00 : f32
    %51 = vector.broadcast %cst_19 : f32 to vector<2x32xf32>
    %52 = arith.addf %51, %50 : vector<2x32xf32>
    %53 = arith.divf %51, %52 : vector<2x32xf32>
    %54 = vector.extract_strided_slice %41 {offsets = [0, 64], sizes = [2, 32], strides = [1, 1]} : vector<2x128xf32> to vector<2x32xf32>
    %55 = math.tanh %54 : vector<2x32xf32>
    %56 = vector.extract_strided_slice %41 {offsets = [0, 96], sizes = [2, 32], strides = [1, 1]} : vector<2x128xf32> to vector<2x32xf32>
    %57 = arith.negf %56 : vector<2x32xf32>
    %58 = math.exp %57 : vector<2x32xf32>
    %cst_20 = arith.constant 1.000000e+00 : f32
    %59 = vector.broadcast %cst_20 : f32 to vector<2x32xf32>
    %60 = arith.addf %59, %58 : vector<2x32xf32>
    %61 = arith.divf %59, %60 : vector<2x32xf32>
    %62 = arith.mulf %53, %32 : vector<2x32xf32>
    %63 = arith.mulf %47, %55 : vector<2x32xf32>
    %64 = arith.addf %62, %63 : vector<2x32xf32>
    %65 = math.tanh %64 : vector<2x32xf32>
    %66 = arith.mulf %61, %65 : vector<2x32xf32>
    %c1_21 = arith.constant 1 : index
    %c0_22 = arith.constant 0 : index
    %c0_23 = arith.constant 0 : index
    %67 = vector.load %arg17[%c1_21, %c0_22, %c0_23] : memref<8x2x32xf32, #tpu.memory_space<vmem>>, vector<1x2x32xf32>
    %68 = vector.shape_cast %67 : vector<1x2x32xf32> to vector<2x32xf32>
    %69 = vector.shape_cast %66 : vector<2x32xf32> to vector<1x2x32xf32>
    tpu.vector_store %arg17[%c1_21, %c0_22, %c0_23], %69 {strides = array<i32>} : memref<8x2x32xf32, #tpu.memory_space<vmem>>, vector<1x2x32xf32>,
    %c2 = arith.constant 2 : index
    %c0_24 = arith.constant 0 : index
    %c0_25 = arith.constant 0 : index
    %70 = vector.load %arg2[%c2, %c0_24, %c0_25] : memref<8x2x128xf32, #tpu.memory_space<vmem>>, vector<1x2x128xf32>
    %71 = vector.shape_cast %70 : vector<1x2x128xf32> to vector<2x128xf32>
    %cst_26 = arith.constant dense<0.000000e+00> : vector<2x128xf32>
    %72 = tpu.matmul %66, %3, %cst_26 {dimension_numbers = #tpu.dot_dimension_numbers<[1], [0], [0], [1], [0, 0, 1, 1], [], []>} : vector<2x32xf32>, vector<32x128xf32>, vector<2x128xf32> -> vector<2x128xf32>
    %73 = arith.addf %71, %72 : vector<2x128xf32>
    %74 = vector.extract_strided_slice %73 {offsets = [0, 0], sizes = [2, 32], strides = [1, 1]} : vector<2x128xf32> to vector<2x32xf32>
    %75 = arith.negf %74 : vector<2x32xf32>
    %76 = math.exp %75 : vector<2x32xf32>
    %cst_27 = arith.constant 1.000000e+00 : f32
    %77 = vector.broadcast %cst_27 : f32 to vector<2x32xf32>
    %78 = arith.addf %77, %76 : vector<2x32xf32>
    %79 = arith.divf %77, %78 : vector<2x32xf32>
    %80 = vector.extract_strided_slice %73 {offsets = [0, 32], sizes = [2, 32], strides = [1, 1]} : vector<2x128xf32> to vector<2x32xf32>
    %81 = arith.negf %80 : vector<2x32xf32>
    %82 = math.exp %81 : vector<2x32xf32>
    %cst_28 = arith.constant 1.000000e+00 : f32
    %83 = vector.broadcast %cst_28 : f32 to vector<2x32xf32>
    %84 = arith.addf %83, %82 : vector<2x32xf32>
    %85 = arith.divf %83, %84 : vector<2x32xf32>
    %86 = vector.extract_strided_slice %73 {offsets = [0, 64], sizes = [2, 32], strides = [1, 1]} : vector<2x128xf32> to vector<2x32xf32>
    %87 = math.tanh %86 : vector<2x32xf32>
    %88 = vector.extract_strided_slice %73 {offsets = [0, 96], sizes = [2, 32], strides = [1, 1]} : vector<2x128xf32> to vector<2x32xf32>
    %89 = arith.negf %88 : vector<2x32xf32>
    %90 = math.exp %89 : vector<2x32xf32>
    %cst_29 = arith.constant 1.000000e+00 : f32
    %91 = vector.broadcast %cst_29 : f32 to vector<2x32xf32>
    %92 = arith.addf %91, %90 : vector<2x32xf32>
    %93 = arith.divf %91, %92 : vector<2x32xf32>
    %94 = arith.mulf %85, %64 : vector<2x32xf32>
    %95 = arith.mulf %79, %87 : vector<2x32xf32>
    %96 = arith.addf %94, %95 : vector<2x32xf32>
    %97 = math.tanh %96 : vector<2x32xf32>
    %98 = arith.mulf %93, %97 : vector<2x32xf32>
    %c2_30 = arith.constant 2 : index
    %c0_31 = arith.constant 0 : index
    %c0_32 = arith.constant 0 : index
    %99 = vector.load %arg17[%c2_30, %c0_31, %c0_32] : memref<8x2x32xf32, #tpu.memory_space<vmem>>, vector<1x2x32xf32>
    %100 = vector.shape_cast %99 : vector<1x2x32xf32> to vector<2x32xf32>
    %101 = vector.shape_cast %98 : vector<2x32xf32> to vector<1x2x32xf32>
    tpu.vector_store %arg17[%c2_30, %c0_31, %c0_32], %101 {strides = array<i32>} : memref<8x2x32xf32, #tpu.memory_space<vmem>>, vector<1x2x32xf32>,
    %c3 = arith.constant 3 : index
    %c0_33 = arith.constant 0 : index
    %c0_34 = arith.constant 0 : index
    %102 = vector.load %arg2[%c3, %c0_33, %c0_34] : memref<8x2x128xf32, #tpu.memory_space<vmem>>, vector<1x2x128xf32>
    %103 = vector.shape_cast %102 : vector<1x2x128xf32> to vector<2x128xf32>
    %cst_35 = arith.constant dense<0.000000e+00> : vector<2x128xf32>
    %104 = tpu.matmul %98, %3, %cst_35 {dimension_numbers = #tpu.dot_dimension_numbers<[1], [0], [0], [1], [0, 0, 1, 1], [], []>} : vector<2x32xf32>, vector<32x128xf32>, vector<2x128xf32> -> vector<2x128xf32>
    %105 = arith.addf %103, %104 : vector<2x128xf32>
    %106 = vector.extract_strided_slice %105 {offsets = [0, 0], sizes = [2, 32], strides = [1, 1]} : vector<2x128xf32> to vector<2x32xf32>
    %107 = arith.negf %106 : vector<2x32xf32>
    %108 = math.exp %107 : vector<2x32xf32>
    %cst_36 = arith.constant 1.000000e+00 : f32
    %109 = vector.broadcast %cst_36 : f32 to vector<2x32xf32>
    %110 = arith.addf %109, %108 : vector<2x32xf32>
    %111 = arith.divf %109, %110 : vector<2x32xf32>
    %112 = vector.extract_strided_slice %105 {offsets = [0, 32], sizes = [2, 32], strides = [1, 1]} : vector<2x128xf32> to vector<2x32xf32>
    %113 = arith.negf %112 : vector<2x32xf32>
    %114 = math.exp %113 : vector<2x32xf32>
    %cst_37 = arith.constant 1.000000e+00 : f32
    %115 = vector.broadcast %cst_37 : f32 to vector<2x32xf32>
    %116 = arith.addf %115, %114 : vector<2x32xf32>
    %117 = arith.divf %115, %116 : vector<2x32xf32>
    %118 = vector.extract_strided_slice %105 {offsets = [0, 64], sizes = [2, 32], strides = [1, 1]} : vector<2x128xf32> to vector<2x32xf32>
    %119 = math.tanh %118 : vector<2x32xf32>
    %120 = vector.extract_strided_slice %105 {offsets = [0, 96], sizes = [2, 32], strides = [1, 1]} : vector<2x128xf32> to vector<2x32xf32>
    %121 = arith.negf %120 : vector<2x32xf32>
    %122 = math.exp %121 : vector<2x32xf32>
    %cst_38 = arith.constant 1.000000e+00 : f32
    %123 = vector.broadcast %cst_38 : f32 to vector<2x32xf32>
    %124 = arith.addf %123, %122 : vector<2x32xf32>
    %125 = arith.divf %123, %124 : vector<2x32xf32>
    %126 = arith.mulf %117, %96 : vector<2x32xf32>
    %127 = arith.mulf %111, %119 : vector<2x32xf32>
    %128 = arith.addf %126, %127 : vector<2x32xf32>
    %129 = math.tanh %128 : vector<2x32xf32>
    %130 = arith.mulf %125, %129 : vector<2x32xf32>
    %c3_39 = arith.constant 3 : index
    %c0_40 = arith.constant 0 : index
    %c0_41 = arith.constant 0 : index
    %131 = vector.load %arg17[%c3_39, %c0_40, %c0_41] : memref<8x2x32xf32, #tpu.memory_space<vmem>>, vector<1x2x32xf32>
    %132 = vector.shape_cast %131 : vector<1x2x32xf32> to vector<2x32xf32>
    %133 = vector.shape_cast %130 : vector<2x32xf32> to vector<1x2x32xf32>
    tpu.vector_store %arg17[%c3_39, %c0_40, %c0_41], %133 {strides = array<i32>} : memref<8x2x32xf32, #tpu.memory_space<vmem>>, vector<1x2x32xf32>,
    %c4 = arith.constant 4 : index
    %c0_42 = arith.constant 0 : index
    %c0_43 = arith.constant 0 : index
    %134 = vector.load %arg2[%c4, %c0_42, %c0_43] : memref<8x2x128xf32, #tpu.memory_space<vmem>>, vector<1x2x128xf32>
    %135 = vector.shape_cast %134 : vector<1x2x128xf32> to vector<2x128xf32>
    %cst_44 = arith.constant dense<0.000000e+00> : vector<2x128xf32>
    %136 = tpu.matmul %130, %3, %cst_44 {dimension_numbers = #tpu.dot_dimension_numbers<[1], [0], [0], [1], [0, 0, 1, 1], [], []>} : vector<2x32xf32>, vector<32x128xf32>, vector<2x128xf32> -> vector<2x128xf32>
    %137 = arith.addf %135, %136 : vector<2x128xf32>
    %138 = vector.extract_strided_slice %137 {offsets = [0, 0], sizes = [2, 32], strides = [1, 1]} : vector<2x128xf32> to vector<2x32xf32>
    %139 = arith.negf %138 : vector<2x32xf32>
    %140 = math.exp %139 : vector<2x32xf32>
    %cst_45 = arith.constant 1.000000e+00 : f32
    %141 = vector.broadcast %cst_45 : f32 to vector<2x32xf32>
    %142 = arith.addf %141, %140 : vector<2x32xf32>
    %143 = arith.divf %141, %142 : vector<2x32xf32>
    %144 = vector.extract_strided_slice %137 {offsets = [0, 32], sizes = [2, 32], strides = [1, 1]} : vector<2x128xf32> to vector<2x32xf32>
    %145 = arith.negf %144 : vector<2x32xf32>
    %146 = math.exp %145 : vector<2x32xf32>
    %cst_46 = arith.constant 1.000000e+00 : f32
    %147 = vector.broadcast %cst_46 : f32 to vector<2x32xf32>
    %148 = arith.addf %147, %146 : vector<2x32xf32>
    %149 = arith.divf %147, %148 : vector<2x32xf32>
    %150 = vector.extract_strided_slice %137 {offsets = [0, 64], sizes = [2, 32], strides = [1, 1]} : vector<2x128xf32> to vector<2x32xf32>
    %151 = math.tanh %150 : vector<2x32xf32>
    %152 = vector.extract_strided_slice %137 {offsets = [0, 96], sizes = [2, 32], strides = [1, 1]} : vector<2x128xf32> to vector<2x32xf32>
    %153 = arith.negf %152 : vector<2x32xf32>
    %154 = math.exp %153 : vector<2x32xf32>
    %cst_47 = arith.constant 1.000000e+00 : f32
    %155 = vector.broadcast %cst_47 : f32 to vector<2x32xf32>
    %156 = arith.addf %155, %154 : vector<2x32xf32>
    %157 = arith.divf %155, %156 : vector<2x32xf32>
    %158 = arith.mulf %149, %128 : vector<2x32xf32>
    %159 = arith.mulf %143, %151 : vector<2x32xf32>
    %160 = arith.addf %158, %159 : vector<2x32xf32>
    %161 = math.tanh %160 : vector<2x32xf32>
    %162 = arith.mulf %157, %161 : vector<2x32xf32>
    %c4_48 = arith.constant 4 : index
    %c0_49 = arith.constant 0 : index
    %c0_50 = arith.constant 0 : index
    %163 = vector.load %arg17[%c4_48, %c0_49, %c0_50] : memref<8x2x32xf32, #tpu.memory_space<vmem>>, vector<1x2x32xf32>
    %164 = vector.shape_cast %163 : vector<1x2x32xf32> to vector<2x32xf32>
    %165 = vector.shape_cast %162 : vector<2x32xf32> to vector<1x2x32xf32>
    tpu.vector_store %arg17[%c4_48, %c0_49, %c0_50], %165 {strides = array<i32>} : memref<8x2x32xf32, #tpu.memory_space<vmem>>, vector<1x2x32xf32>,
    %c5 = arith.constant 5 : index
    %c0_51 = arith.constant 0 : index
    %c0_52 = arith.constant 0 : index
    %166 = vector.load %arg2[%c5, %c0_51, %c0_52] : memref<8x2x128xf32, #tpu.memory_space<vmem>>, vector<1x2x128xf32>
    %167 = vector.shape_cast %166 : vector<1x2x128xf32> to vector<2x128xf32>
    %cst_53 = arith.constant dense<0.000000e+00> : vector<2x128xf32>
    %168 = tpu.matmul %162, %3, %cst_53 {dimension_numbers = #tpu.dot_dimension_numbers<[1], [0], [0], [1], [0, 0, 1, 1], [], []>} : vector<2x32xf32>, vector<32x128xf32>, vector<2x128xf32> -> vector<2x128xf32>
    %169 = arith.addf %167, %168 : vector<2x128xf32>
    %170 = vector.extract_strided_slice %169 {offsets = [0, 0], sizes = [2, 32], strides = [1, 1]} : vector<2x128xf32> to vector<2x32xf32>
    %171 = arith.negf %170 : vector<2x32xf32>
    %172 = math.exp %171 : vector<2x32xf32>
    %cst_54 = arith.constant 1.000000e+00 : f32
    %173 = vector.broadcast %cst_54 : f32 to vector<2x32xf32>
    %174 = arith.addf %173, %172 : vector<2x32xf32>
    %175 = arith.divf %173, %174 : vector<2x32xf32>
    %176 = vector.extract_strided_slice %169 {offsets = [0, 32], sizes = [2, 32], strides = [1, 1]} : vector<2x128xf32> to vector<2x32xf32>
    %177 = arith.negf %176 : vector<2x32xf32>
    %178 = math.exp %177 : vector<2x32xf32>
    %cst_55 = arith.constant 1.000000e+00 : f32
    %179 = vector.broadcast %cst_55 : f32 to vector<2x32xf32>
    %180 = arith.addf %179, %178 : vector<2x32xf32>
    %181 = arith.divf %179, %180 : vector<2x32xf32>
    %182 = vector.extract_strided_slice %169 {offsets = [0, 64], sizes = [2, 32], strides = [1, 1]} : vector<2x128xf32> to vector<2x32xf32>
    %183 = math.tanh %182 : vector<2x32xf32>
    %184 = vector.extract_strided_slice %169 {offsets = [0, 96], sizes = [2, 32], strides = [1, 1]} : vector<2x128xf32> to vector<2x32xf32>
    %185 = arith.negf %184 : vector<2x32xf32>
    %186 = math.exp %185 : vector<2x32xf32>
    %cst_56 = arith.constant 1.000000e+00 : f32
    %187 = vector.broadcast %cst_56 : f32 to vector<2x32xf32>
    %188 = arith.addf %187, %186 : vector<2x32xf32>
    %189 = arith.divf %187, %188 : vector<2x32xf32>
    %190 = arith.mulf %181, %160 : vector<2x32xf32>
    %191 = arith.mulf %175, %183 : vector<2x32xf32>
    %192 = arith.addf %190, %191 : vector<2x32xf32>
    %193 = math.tanh %192 : vector<2x32xf32>
    %194 = arith.mulf %189, %193 : vector<2x32xf32>
    %c5_57 = arith.constant 5 : index
    %c0_58 = arith.constant 0 : index
    %c0_59 = arith.constant 0 : index
    %195 = vector.load %arg17[%c5_57, %c0_58, %c0_59] : memref<8x2x32xf32, #tpu.memory_space<vmem>>, vector<1x2x32xf32>
    %196 = vector.shape_cast %195 : vector<1x2x32xf32> to vector<2x32xf32>
    %197 = vector.shape_cast %194 : vector<2x32xf32> to vector<1x2x32xf32>
    tpu.vector_store %arg17[%c5_57, %c0_58, %c0_59], %197 {strides = array<i32>} : memref<8x2x32xf32, #tpu.memory_space<vmem>>, vector<1x2x32xf32>,
    %c6 = arith.constant 6 : index
    %c0_60 = arith.constant 0 : index
    %c0_61 = arith.constant 0 : index
    %198 = vector.load %arg2[%c6, %c0_60, %c0_61] : memref<8x2x128xf32, #tpu.memory_space<vmem>>, vector<1x2x128xf32>
    %199 = vector.shape_cast %198 : vector<1x2x128xf32> to vector<2x128xf32>
    %cst_62 = arith.constant dense<0.000000e+00> : vector<2x128xf32>
    %200 = tpu.matmul %194, %3, %cst_62 {dimension_numbers = #tpu.dot_dimension_numbers<[1], [0], [0], [1], [0, 0, 1, 1], [], []>} : vector<2x32xf32>, vector<32x128xf32>, vector<2x128xf32> -> vector<2x128xf32>
    %201 = arith.addf %199, %200 : vector<2x128xf32>
    %202 = vector.extract_strided_slice %201 {offsets = [0, 0], sizes = [2, 32], strides = [1, 1]} : vector<2x128xf32> to vector<2x32xf32>
    %203 = arith.negf %202 : vector<2x32xf32>
    %204 = math.exp %203 : vector<2x32xf32>
    %cst_63 = arith.constant 1.000000e+00 : f32
    %205 = vector.broadcast %cst_63 : f32 to vector<2x32xf32>
    %206 = arith.addf %205, %204 : vector<2x32xf32>
    %207 = arith.divf %205, %206 : vector<2x32xf32>
    %208 = vector.extract_strided_slice %201 {offsets = [0, 32], sizes = [2, 32], strides = [1, 1]} : vector<2x128xf32> to vector<2x32xf32>
    %209 = arith.negf %208 : vector<2x32xf32>
    %210 = math.exp %209 : vector<2x32xf32>
    %cst_64 = arith.constant 1.000000e+00 : f32
    %211 = vector.broadcast %cst_64 : f32 to vector<2x32xf32>
    %212 = arith.addf %211, %210 : vector<2x32xf32>
    %213 = arith.divf %211, %212 : vector<2x32xf32>
    %214 = vector.extract_strided_slice %201 {offsets = [0, 64], sizes = [2, 32], strides = [1, 1]} : vector<2x128xf32> to vector<2x32xf32>
    %215 = math.tanh %214 : vector<2x32xf32>
    %216 = vector.extract_strided_slice %201 {offsets = [0, 96], sizes = [2, 32], strides = [1, 1]} : vector<2x128xf32> to vector<2x32xf32>
    %217 = arith.negf %216 : vector<2x32xf32>
    %218 = math.exp %217 : vector<2x32xf32>
    %cst_65 = arith.constant 1.000000e+00 : f32
    %219 = vector.broadcast %cst_65 : f32 to vector<2x32xf32>
    %220 = arith.addf %219, %218 : vector<2x32xf32>
    %221 = arith.divf %219, %220 : vector<2x32xf32>
    %222 = arith.mulf %213, %192 : vector<2x32xf32>
    %223 = arith.mulf %207, %215 : vector<2x32xf32>
    %224 = arith.addf %222, %223 : vector<2x32xf32>
    %225 = math.tanh %224 : vector<2x32xf32>
    %226 = arith.mulf %221, %225 : vector<2x32xf32>
    %c6_66 = arith.constant 6 : index
    %c0_67 = arith.constant 0 : index
    %c0_68 = arith.constant 0 : index
    %227 = vector.load %arg17[%c6_66, %c0_67, %c0_68] : memref<8x2x32xf32, #tpu.memory_space<vmem>>, vector<1x2x32xf32>
    %228 = vector.shape_cast %227 : vector<1x2x32xf32> to vector<2x32xf32>
    %229 = vector.shape_cast %226 : vector<2x32xf32> to vector<1x2x32xf32>
    tpu.vector_store %arg17[%c6_66, %c0_67, %c0_68], %229 {strides = array<i32>} : memref<8x2x32xf32, #tpu.memory_space<vmem>>, vector<1x2x32xf32>,
    %c7 = arith.constant 7 : index
    %c0_69 = arith.constant 0 : index
    %c0_70 = arith.constant 0 : index
    %230 = vector.load %arg2[%c7, %c0_69, %c0_70] : memref<8x2x128xf32, #tpu.memory_space<vmem>>, vector<1x2x128xf32>
    %231 = vector.shape_cast %230 : vector<1x2x128xf32> to vector<2x128xf32>
    %cst_71 = arith.constant dense<0.000000e+00> : vector<2x128xf32>
    %232 = tpu.matmul %226, %3, %cst_71 {dimension_numbers = #tpu.dot_dimension_numbers<[1], [0], [0], [1], [0, 0, 1, 1], [], []>} : vector<2x32xf32>, vector<32x128xf32>, vector<2x128xf32> -> vector<2x128xf32>
    %233 = arith.addf %231, %232 : vector<2x128xf32>
    %234 = vector.extract_strided_slice %233 {offsets = [0, 0], sizes = [2, 32], strides = [1, 1]} : vector<2x128xf32> to vector<2x32xf32>
    %235 = arith.negf %234 : vector<2x32xf32>
    %236 = math.exp %235 : vector<2x32xf32>
    %cst_72 = arith.constant 1.000000e+00 : f32
    %237 = vector.broadcast %cst_72 : f32 to vector<2x32xf32>
    %238 = arith.addf %237, %236 : vector<2x32xf32>
    %239 = arith.divf %237, %238 : vector<2x32xf32>
    %240 = vector.extract_strided_slice %233 {offsets = [0, 32], sizes = [2, 32], strides = [1, 1]} : vector<2x128xf32> to vector<2x32xf32>
    %241 = arith.negf %240 : vector<2x32xf32>
    %242 = math.exp %241 : vector<2x32xf32>
    %cst_73 = arith.constant 1.000000e+00 : f32
    %243 = vector.broadcast %cst_73 : f32 to vector<2x32xf32>
    %244 = arith.addf %243, %242 : vector<2x32xf32>
    %245 = arith.divf %243, %244 : vector<2x32xf32>
    %246 = vector.extract_strided_slice %233 {offsets = [0, 64], sizes = [2, 32], strides = [1, 1]} : vector<2x128xf32> to vector<2x32xf32>
    %247 = math.tanh %246 : vector<2x32xf32>
    %248 = vector.extract_strided_slice %233 {offsets = [0, 96], sizes = [2, 32], strides = [1, 1]} : vector<2x128xf32> to vector<2x32xf32>
    %249 = arith.negf %248 : vector<2x32xf32>
    %250 = math.exp %249 : vector<2x32xf32>
    %cst_74 = arith.constant 1.000000e+00 : f32
    %251 = vector.broadcast %cst_74 : f32 to vector<2x32xf32>
    %252 = arith.addf %251, %250 : vector<2x32xf32>
    %253 = arith.divf %251, %252 : vector<2x32xf32>
    %254 = arith.mulf %245, %224 : vector<2x32xf32>
    %255 = arith.mulf %239, %247 : vector<2x32xf32>
    %256 = arith.addf %254, %255 : vector<2x32xf32>
    %257 = math.tanh %256 : vector<2x32xf32>
    %258 = arith.mulf %253, %257 : vector<2x32xf32>
    %c7_75 = arith.constant 7 : index
    %c0_76 = arith.constant 0 : index
    %c0_77 = arith.constant 0 : index
    %259 = vector.load %arg17[%c7_75, %c0_76, %c0_77] : memref<8x2x32xf32, #tpu.memory_space<vmem>>, vector<1x2x32xf32>
    %260 = vector.shape_cast %259 : vector<1x2x32xf32> to vector<2x32xf32>
    %261 = vector.shape_cast %258 : vector<2x32xf32> to vector<1x2x32xf32>
    tpu.vector_store %arg17[%c7_75, %c0_76, %c0_77], %261 {strides = array<i32>} : memref<8x2x32xf32, #tpu.memory_space<vmem>>, vector<1x2x32xf32>,
    %c0_78 = arith.constant 0 : index
    %c0_79 = arith.constant 0 : index
    %262 = vector.load %arg15[%c0_78, %c0_79] : memref<2x32xf32, #tpu.memory_space<vmem>>, vector<2x32xf32>
    tpu.vector_store %arg15[%c0_78, %c0_79], %258 {strides = array<i32>} : memref<2x32xf32, #tpu.memory_space<vmem>>, vector<2x32xf32>,
    %c0_80 = arith.constant 0 : index
    %c0_81 = arith.constant 0 : index
    %263 = vector.load %arg16[%c0_80, %c0_81] : memref<2x32xf32, #tpu.memory_space<vmem>>, vector<2x32xf32>
    tpu.vector_store %arg16[%c0_80, %c0_81], %256 {strides = array<i32>} : memref<2x32xf32, #tpu.memory_space<vmem>>, vector<2x32xf32>,
    %c0_82 = arith.constant 0 : index
    %c0_83 = arith.constant 0 : index
    %c0_84 = arith.constant 0 : index
    %264 = vector.load %arg17[%c0_82, %c0_83, %c0_84] : memref<8x2x32xf32, #tpu.memory_space<vmem>>, vector<8x2x32xf32>
    %265 = tpu.transpose %264, [1, 0, 2] : vector<8x2x32xf32> -> vector<2x8x32xf32>
    %c0_85 = arith.constant 0 : index
    %c0_86 = arith.constant 0 : index
    %c0_87 = arith.constant 0 : index
    %266 = vector.load %arg11[%c0_85, %c0_86, %c0_87] : memref<2x8x32xf32, #tpu.memory_space<vmem>>, vector<2x8x32xf32>
    tpu.vector_store %arg11[%c0_85, %c0_86, %c0_87], %265 {strides = array<i32>} : memref<2x8x32xf32, #tpu.memory_space<vmem>>, vector<2x8x32xf32>,
    %267 = vector.shape_cast %265 : vector<2x8x32xf32> to vector<16x32xf32>
    %c0_88 = arith.constant 0 : index
    %c0_89 = arith.constant 0 : index
    %268 = vector.load %arg8[%c0_88, %c0_89] : memref<32x32xf32, #tpu.memory_space<vmem>>, vector<32x32xf32>
    %cst_90 = arith.constant dense<0.000000e+00> : vector<16x32xf32>
    %269 = tpu.matmul %267, %268, %cst_90 {dimension_numbers = #tpu.dot_dimension_numbers<[1], [0], [0], [1], [0, 0, 1, 1], [], []>} : vector<16x32xf32>, vector<32x32xf32>, vector<16x32xf32> -> vector<16x32xf32>
    %c0_91 = arith.constant 0 : index
    %c0_92 = arith.constant 0 : index
    %270 = vector.load %arg10[%c0_91, %c0_92] : memref<32x32xf32, #tpu.memory_space<vmem>>, vector<32x32xf32>
    %cst_93 = arith.constant dense<0.000000e+00> : vector<16x32xf32>
    %271 = tpu.matmul %267, %270, %cst_93 {dimension_numbers = #tpu.dot_dimension_numbers<[1], [0], [0], [1], [0, 0, 1, 1], [], []>} : vector<16x32xf32>, vector<32x32xf32>, vector<16x32xf32> -> vector<16x32xf32>
    %272 = vector.extract_strided_slice %269 {offsets = [0, 0], sizes = [8, 32], strides = [1, 1]} : vector<16x32xf32> to vector<8x32xf32>
    %c0_94 = arith.constant 0 : index
    %c0_95 = arith.constant 0 : index
    %c0_96 = arith.constant 0 : index
    %273 = vector.load %arg6[%c0_94, %c0_95, %c0_96] : memref<2x32x8xf32, #tpu.memory_space<vmem>>, vector<1x32x8xf32>
    %274 = vector.shape_cast %273 : vector<1x32x8xf32> to vector<32x8xf32>
    %cst_97 = arith.constant dense<0.000000e+00> : vector<8x8xf32>
    %275 = tpu.matmul %272, %274, %cst_97 {dimension_numbers = #tpu.dot_dimension_numbers<[1], [0], [0], [1], [0, 0, 1, 1], [], []>} : vector<8x32xf32>, vector<32x8xf32>, vector<8x8xf32> -> vector<8x8xf32>
    %276 = vector.extract_strided_slice %269 {offsets = [8, 0], sizes = [8, 32], strides = [1, 1]} : vector<16x32xf32> to vector<8x32xf32>
    %c1_98 = arith.constant 1 : index
    %c0_99 = arith.constant 0 : index
    %c0_100 = arith.constant 0 : index
    %277 = vector.load %arg6[%c1_98, %c0_99, %c0_100] : memref<2x32x8xf32, #tpu.memory_space<vmem>>, vector<1x32x8xf32>
    %278 = vector.shape_cast %277 : vector<1x32x8xf32> to vector<32x8xf32>
    %cst_101 = arith.constant dense<0.000000e+00> : vector<8x8xf32>
    %279 = tpu.matmul %276, %278, %cst_101 {dimension_numbers = #tpu.dot_dimension_numbers<[1], [0], [0], [1], [0, 0, 1, 1], [], []>} : vector<8x32xf32>, vector<32x8xf32>, vector<8x8xf32> -> vector<8x8xf32>
    %280 = tpu.concatenate %275, %279 in 0 : vector<8x8xf32>, vector<8x8xf32> -> vector<16x8xf32>
    %cst_102 = arith.constant dense<0xFF800000> : vector<16xf32>
    %281 = vector.multi_reduction <maximumf>, %280, %cst_102 [1] : vector<16x8xf32> to vector<16xf32>
    %282 = vector.shape_cast %281 : vector<16xf32> to vector<16x1xf32>
    %283 = vector.broadcast %282 : vector<16x1xf32> to vector<16x8xf32>
    %284 = arith.subf %280, %283 : vector<16x8xf32>
    %285 = math.exp %284 : vector<16x8xf32>
    %cst_103 = arith.constant dense<0.000000e+00> : vector<16xf32>
    %286 = vector.multi_reduction <add>, %285, %cst_103 [1] : vector<16x8xf32> to vector<16xf32>
    %287 = vector.shape_cast %286 : vector<16xf32> to vector<16x1xf32>
    %288 = tpu.reciprocal %287 {approx = true} : vector<16x1xf32> -> vector<16x1xf32>
    %289 = vector.broadcast %288 : vector<16x1xf32> to vector<16x8xf32>
    %290 = arith.mulf %285, %289 : vector<16x8xf32>
    %291 = vector.extract_strided_slice %290 {offsets = [0, 0], sizes = [8, 8], strides = [1, 1]} : vector<16x8xf32> to vector<8x8xf32>
    %c0_104 = arith.constant 0 : index
    %c0_105 = arith.constant 0 : index
    %c0_106 = arith.constant 0 : index
    %292 = vector.load %arg5[%c0_104, %c0_105, %c0_106] : memref<2x8x32xf32, #tpu.memory_space<vmem>>, vector<1x8x32xf32>
    %293 = vector.shape_cast %292 : vector<1x8x32xf32> to vector<8x32xf32>
    %cst_107 = arith.constant dense<0.000000e+00> : vector<8x32xf32>
    %294 = tpu.matmul %291, %293, %cst_107 {dimension_numbers = #tpu.dot_dimension_numbers<[1], [0], [0], [1], [0, 0, 1, 1], [], []>} : vector<8x8xf32>, vector<8x32xf32>, vector<8x32xf32> -> vector<8x32xf32>
    %295 = vector.extract_strided_slice %290 {offsets = [8, 0], sizes = [8, 8], strides = [1, 1]} : vector<16x8xf32> to vector<8x8xf32>
    %c1_108 = arith.constant 1 : index
    %c0_109 = arith.constant 0 : index
    %c0_110 = arith.constant 0 : index
    %296 = vector.load %arg5[%c1_108, %c0_109, %c0_110] : memref<2x8x32xf32, #tpu.memory_space<vmem>>, vector<1x8x32xf32>
    %297 = vector.shape_cast %296 : vector<1x8x32xf32> to vector<8x32xf32>
    %cst_111 = arith.constant dense<0.000000e+00> : vector<8x32xf32>
    %298 = tpu.matmul %295, %297, %cst_111 {dimension_numbers = #tpu.dot_dimension_numbers<[1], [0], [0], [1], [0, 0, 1, 1], [], []>} : vector<8x8xf32>, vector<8x32xf32>, vector<8x32xf32> -> vector<8x32xf32>
    %299 = tpu.concatenate %294, %298 in 0 : vector<8x32xf32>, vector<8x32xf32> -> vector<16x32xf32>
    %c0_112 = arith.constant 0 : index
    %c0_113 = arith.constant 0 : index
    %300 = vector.load %arg9[%c0_112, %c0_113] : memref<32x32xf32, #tpu.memory_space<vmem>>, vector<32x32xf32>
    %cst_114 = arith.constant dense<0.000000e+00> : vector<16x32xf32>
    %301 = tpu.matmul %299, %300, %cst_114 {dimension_numbers = #tpu.dot_dimension_numbers<[1], [0], [0], [1], [0, 0, 1, 1], [], []>} : vector<16x32xf32>, vector<32x32xf32>, vector<16x32xf32> -> vector<16x32xf32>
    %302 = arith.addf %301, %271 : vector<16x32xf32>
    %303 = math.tanh %302 : vector<16x32xf32>
    %304 = vector.shape_cast %303 : vector<16x32xf32> to vector<2x8x32xf32>
    %c0_115 = arith.constant 0 : index
    %c0_116 = arith.constant 0 : index
    %c0_117 = arith.constant 0 : index
    %305 = vector.load %arg12[%c0_115, %c0_116, %c0_117] : memref<2x8x32xf32, #tpu.memory_space<vmem>>, vector<2x8x32xf32>
    tpu.vector_store %arg12[%c0_115, %c0_116, %c0_117], %304 {strides = array<i32>} : memref<2x8x32xf32, #tpu.memory_space<vmem>>, vector<2x8x32xf32>,
    %306 = vector.shape_cast %299 : vector<16x32xf32> to vector<2x8x32xf32>
    %c0_118 = arith.constant 0 : index
    %c0_119 = arith.constant 0 : index
    %c0_120 = arith.constant 0 : index
    %307 = vector.load %arg13[%c0_118, %c0_119, %c0_120] : memref<2x8x32xf32, #tpu.memory_space<vmem>>, vector<2x8x32xf32>
    tpu.vector_store %arg13[%c0_118, %c0_119, %c0_120], %306 {strides = array<i32>} : memref<2x8x32xf32, #tpu.memory_space<vmem>>, vector<2x8x32xf32>,
    %308 = vector.shape_cast %290 : vector<16x8xf32> to vector<2x8x8xf32>
    %c0_121 = arith.constant 0 : index
    %c0_122 = arith.constant 0 : index
    %c0_123 = arith.constant 0 : index
    %309 = vector.load %arg14[%c0_121, %c0_122, %c0_123] : memref<2x8x8xf32, #tpu.memory_space<vmem>>, vector<2x8x8xf32>
    tpu.vector_store %arg14[%c0_121, %c0_122, %c0_123], %308 {strides = array<i32>} : memref<2x8x8xf32, #tpu.memory_space<vmem>>, vector<2x8x8xf32>,
    return
  }
  func.func @transform_0(%arg0: i32, %arg1: i32) -> (i32, i32, i32) {
    %c0_i32 = arith.constant 0 : i32
    %c0_i32_0 = arith.constant 0 : i32
    return %arg1, %arg0, %c0_i32 : i32, i32, i32
  }
  func.func @transform_1(%arg0: i32, %arg1: i32) -> (i32, i32) {
    %c0_i32 = arith.constant 0 : i32
    %c0_i32_0 = arith.constant 0 : i32
    return %arg0, %c0_i32 : i32, i32
  }
  func.func @transform_2(%arg0: i32, %arg1: i32) -> (i32, i32) {
    %c0_i32 = arith.constant 0 : i32
    %c0_i32_0 = arith.constant 0 : i32
    return %arg0, %c0_i32 : i32, i32
  }
  func.func @transform_3(%arg0: i32, %arg1: i32) -> (i32, i32, i32) {
    %c0_i32 = arith.constant 0 : i32
    %c0_i32_0 = arith.constant 0 : i32
    %c0_i32_1 = arith.constant 0 : i32
    return %arg0, %c0_i32, %c0_i32_0 : i32, i32, i32
  }
  func.func @transform_4(%arg0: i32, %arg1: i32) -> (i32, i32, i32) {
    %c0_i32 = arith.constant 0 : i32
    %c0_i32_0 = arith.constant 0 : i32
    %c0_i32_1 = arith.constant 0 : i32
    return %arg0, %c0_i32, %c0_i32_0 : i32, i32, i32
  }
  func.func @transform_5(%arg0: i32, %arg1: i32) -> (i32, i32) {
    %c0_i32 = arith.constant 0 : i32
    %c0_i32_0 = arith.constant 0 : i32
    %c0_i32_1 = arith.constant 0 : i32
    return %c0_i32, %c0_i32_0 : i32, i32
  }
  func.func @transform_6(%arg0: i32, %arg1: i32) -> (i32, i32) {
    %c0_i32 = arith.constant 0 : i32
    %c0_i32_0 = arith.constant 0 : i32
    %c0_i32_1 = arith.constant 0 : i32
    return %c0_i32, %c0_i32_0 : i32, i32
  }
  func.func @transform_7(%arg0: i32, %arg1: i32) -> (i32, i32) {
    %c0_i32 = arith.constant 0 : i32
    %c0_i32_0 = arith.constant 0 : i32
    %c0_i32_1 = arith.constant 0 : i32
    return %c0_i32, %c0_i32_0 : i32, i32
  }
  func.func @transform_8(%arg0: i32, %arg1: i32) -> (i32, i32) {
    %c0_i32 = arith.constant 0 : i32
    %c0_i32_0 = arith.constant 0 : i32
    %c0_i32_1 = arith.constant 0 : i32
    return %c0_i32, %c0_i32_0 : i32, i32
  }
  func.func @transform_9(%arg0: i32, %arg1: i32) -> (i32, i32, i32) {
    %c0_i32 = arith.constant 0 : i32
    %c0_i32_0 = arith.constant 0 : i32
    return %arg0, %arg1, %c0_i32 : i32, i32, i32
  }
  func.func @transform_10(%arg0: i32, %arg1: i32) -> (i32, i32, i32) {
    %c0_i32 = arith.constant 0 : i32
    %c0_i32_0 = arith.constant 0 : i32
    return %arg0, %arg1, %c0_i32 : i32, i32, i32
  }
  func.func @transform_11(%arg0: i32, %arg1: i32) -> (i32, i32, i32) {
    %c0_i32 = arith.constant 0 : i32
    %c0_i32_0 = arith.constant 0 : i32
    return %arg0, %arg1, %c0_i32 : i32, i32, i32
  }
  func.func @transform_12(%arg0: i32, %arg1: i32) -> (i32, i32, i32) {
    %c0_i32 = arith.constant 0 : i32
    %c0_i32_0 = arith.constant 0 : i32
    return %arg0, %arg1, %c0_i32 : i32, i32, i32
  }
  func.func @transform_13(%arg0: i32, %arg1: i32) -> (i32, i32) {
    %c0_i32 = arith.constant 0 : i32
    %c0_i32_0 = arith.constant 0 : i32
    return %arg0, %c0_i32 : i32, i32
  }
  func.func @transform_14(%arg0: i32, %arg1: i32) -> (i32, i32) {
    %c0_i32 = arith.constant 0 : i32
    %c0_i32_0 = arith.constant 0 : i32
    return %arg0, %c0_i32 : i32, i32
  }
}

</mosaic_0001>

<llo_original>
// kernel: tpu_custom_call.1
$region0: #{tpu_custom_call.1}
  #allocation0 [shape = 'u32[]', space=smem, size = 0x4, offset = 0x4, fixed_abs, tag = 'smem constant byte address 0x4 - core index']
  #allocation1 [shape = 'u32[72,128]{1,0:T(1,128)}', space=vmem, size = 0x9000, scoped, tag = 'internal scratch']
  #allocation2 [shape = 'f32[8,2,32]{2,1,0:T(2,128)}', space=vmem, size = 0x2000, scoped, tag = 'scratch operand']
  %s0 = inlined_call_operand.vmem [shape: f32[8,2,128], index: 0, kind: input, shape index: {}]
  %s1 = inlined_call_operand.hbm [shape: f32[2,32], index: 1, kind: input, shape index: {}]
  %s2 = inlined_call_operand.hbm [shape: f32[2,32], index: 2, kind: input, shape index: {}]
  %s3 = inlined_call_operand.hbm [shape: f32[2,8,32], index: 3, kind: input, shape index: {}]
  %s4 = inlined_call_operand.vmem [shape: f32[2,32,8], index: 4, kind: input, shape index: {}]
  %s5 = inlined_call_operand.vmem [shape: f32[32,128], index: 5, kind: input, shape index: {}]
  %s6 = inlined_call_operand.vmem [shape: f32[32,32], index: 6, kind: input, shape index: {}]
  %s7 = inlined_call_operand.hbm [shape: f32[32,32], index: 7, kind: input, shape index: {}]
  %s8 = inlined_call_operand.hbm [shape: f32[32,32], index: 8, kind: input, shape index: {}]
  %s9 = inlined_call_operand.hbm [shape: f32[2,8,32], index: 9, kind: output, shape index: {0}]
  %s10 = inlined_call_operand.hbm [shape: f32[2,8,32], index: 10, kind: output, shape index: {1}]
  %s11 = inlined_call_operand.hbm [shape: f32[2,8,32], index: 11, kind: output, shape index: {2}]
  %s12 = inlined_call_operand.hbm [shape: f32[2,8,8], index: 12, kind: output, shape index: {3}]
  %s13 = inlined_call_operand.hbm [shape: f32[2,32], index: 13, kind: output, shape index: {4}]
  %s14 = inlined_call_operand.hbm [shape: f32[2,32], index: 14, kind: output, shape index: {5}]
  %15 = xla_tuple %s9, %s10, %s11, %s12, %s13, %s14
  %s16 = sld [smem:[#allocation0]]
  $region110: #{tpu_custom_call.1} parent=0
    _
  %s18 = ssub.s32 1, %s16
  %s19 = scalar_select 0, %s18, %s16
  $region1: #{tpu_custom_call.1} parent=0
    #allocation3 [shape = 'u8[1024]{0}', space=vmem, size = 0x400, scoped, tag = 'input window, operand 1, single buffered']
    #allocation4 [shape = 's32[1]{0}', space=sflag, size = 0x4, scoped, tag = 'scoped memory for tpu_custom_call.1']
    #allocation5 [shape = 's32[1]{0}', space=sflag, size = 0x4, scoped, tag = 'scoped memory for tpu_custom_call.1']
    #allocation6 [shape = 'u8[1024]{0}', space=vmem, size = 0x400, scoped, tag = 'input window, operand 2, single buffered']
    #allocation7 [shape = 's32[1]{0}', space=sflag, size = 0x4, scoped, tag = 'scoped memory for tpu_custom_call.1']
    #allocation8 [shape = 'u8[8192]{0}', space=vmem, size = 0x2000, scoped, tag = 'input window, operand 3, single buffered']
    #allocation9 [shape = 'u8[16384]{0}', space=vmem, size = 0x4000, scoped, tag = 'input window, operand 7, single buffered']
    #allocation10 [shape = 's32[1]{0}', space=sflag, size = 0x4, scoped, tag = 'scoped memory for tpu_custom_call.1']
    #allocation11 [shape = 'u8[16384]{0}', space=vmem, size = 0x4000, scoped, tag = 'input window, operand 8, single buffered']
    #allocation12 [shape = 'u8[8192]{0}', space=vmem, size = 0x2000, scoped, tag = 'output window, operand 0, single buffered']
    #allocation13 [shape = 'u8[8192]{0}', space=vmem, size = 0x2000, scoped, tag = 'output window, operand 1, single buffered']
    #allocation14 [shape = 's32[1]{0}', space=sflag, size = 0x4, scoped, tag = 'scoped memory for tpu_custom_call.1']
    #allocation15 [shape = 'u8[8192]{0}', space=vmem, size = 0x2000, scoped, tag = 'output window, operand 2, single buffered']
    #allocation16 [shape = 'u8[8192]{0}', space=vmem, size = 0x2000, scoped, tag = 'output window, operand 3, single buffered']
    #allocation17 [shape = 's32[1]{0}', space=sflag, size = 0x4, scoped, tag = 'scoped memory for tpu_custom_call.1']
    #allocation18 [shape = 'u8[1024]{0}', space=vmem, size = 0x400, scoped, tag = 'output window, operand 4, single buffered']
    #allocation19 [shape = 'u8[1024]{0}', space=vmem, size = 0x400, scoped, tag = 'output window, operand 5, single buffered']
    #allocation20 [shape = 's32[1]{0}', space=sflag, size = 0x4, scoped, tag = 'scoped memory for tpu_custom_call.1']
    %20 = vsyncpa [#allocation4], 0
    %21 = vsyncpa [#allocation7], 0
    %22 = vsyncpa [#allocation10], 0
    %23 = vsyncpa [#allocation5], 0
    %24 = vsyncpa [#allocation14], 0
    %25 = vsyncpa [#allocation17], 0
    %26 = vsyncpa [#allocation20], 0
    // Predicated region
    $region2: #{tpu_custom_call.1} parent=1 // pred_check
      _
    $region3: #{tpu_custom_call.1} parent=1 // pred_check_branch
      %28 = sbr.rel (0) target = $region5
    $region4: #{tpu_custom_call.1} parent=1 // pred_region
      _
    $region5: #{tpu_custom_call.1} parent=1 // pred_fallthru
      _
    // Predicated region
    $region6: #{tpu_custom_call.1} parent=1 // pred_check
      _
    $region7: #{tpu_custom_call.1} parent=1 // pred_check_branch
      %30 = sbr.rel (0) target = $region9
    $region8: #{tpu_custom_call.1} parent=1 // pred_region
      %32 = vsyncadd [#allocation4], 0
      %s34 = sshll.u32 %s1, 4
      %s35 = int_to_ptr.hbm [resolvable:$true] %s34
      %s36 = sshll.u32 [#allocation3], 4
      %s37 = int_to_ptr.vmem [resolvable:$true] %s36
      %39 = dma.hbm_to_vmem [thread:$0]  %s35, 32, %s37, [#allocation4]
    $region9: #{tpu_custom_call.1} parent=1 // pred_fallthru
      _
    // Predicated region
    $region10: #{tpu_custom_call.1} parent=1 // pred_check
      _
    $region11: #{tpu_custom_call.1} parent=1 // pred_check_branch
      %41 = sbr.rel (0) target = $region13
    $region12: #{tpu_custom_call.1} parent=1 // pred_region
      %43 = vsyncadd [#allocation7], 0
      %s45 = sshll.u32 %s2, 4
      %s46 = int_to_ptr.hbm [resolvable:$true] %s45
      %s47 = sshll.u32 [#allocation6], 4
      %s48 = int_to_ptr.vmem [resolvable:$true] %s47
      %50 = dma.hbm_to_vmem [thread:$0]  %s46, 32, %s48, [#allocation7]
    $region13: #{tpu_custom_call.1} parent=1 // pred_fallthru
      _
    // Predicated region
    $region14: #{tpu_custom_call.1} parent=1 // pred_check
      _
    $region15: #{tpu_custom_call.1} parent=1 // pred_check_branch
      %52 = sbr.rel (0) target = $region17
    $region16: #{tpu_custom_call.1} parent=1 // pred_region
      %54 = vsyncadd [#allocation7], 0
      %s55 = sshll.u32 %s3, 4
      %s56 = int_to_ptr.hbm [resolvable:$true] %s55
      %s57 = sshll.u32 [#allocation8], 4
      %s58 = int_to_ptr.vmem [resolvable:$true] %s57
      %63 = dma.hbm_to_vmem [thread:$0]  %s56, 256, %s58, [#allocation7], 128, 128, 8
    $region17: #{tpu_custom_call.1} parent=1 // pred_fallthru
      _
    // Predicated region
    $region18: #{tpu_custom_call.1} parent=1 // pred_check
      _
    $region19: #{tpu_custom_call.1} parent=1 // pred_check_branch
      %65 = sbr.rel (0) target = $region21
    $region20: #{tpu_custom_call.1} parent=1 // pred_region
      _
    $region21: #{tpu_custom_call.1} parent=1 // pred_fallthru
      _
    // Predicated region
    $region22: #{tpu_custom_call.1} parent=1 // pred_check
      _
    $region23: #{tpu_custom_call.1} parent=1 // pred_check_branch
      %67 = sbr.rel (0) target = $region25
    $region24: #{tpu_custom_call.1} parent=1 // pred_region
      _
    $region25: #{tpu_custom_call.1} parent=1 // pred_fallthru
      _
    // Predicated region
    $region26: #{tpu_custom_call.1} parent=1 // pred_check
      _
    $region27: #{tpu_custom_call.1} parent=1 // pred_check_branch
      %69 = sbr.rel (0) target = $region29
    $region28: #{tpu_custom_call.1} parent=1 // pred_region
      _
    $region29: #{tpu_custom_call.1} parent=1 // pred_fallthru
      _
    // Predicated region
    $region30: #{tpu_custom_call.1} parent=1 // pred_check
      _
    $region31: #{tpu_custom_call.1} parent=1 // pred_check_branch
      %71 = sbr.rel (0) target = $region33
    $region32: #{tpu_custom_call.1} parent=1 // pred_region
      %73 = vsyncadd [#allocation10], 0
      %s74 = sshll.u32 %s7, 4
      %s75 = int_to_ptr.hbm [resolvable:$true] %s74
      %s76 = sshll.u32 [#allocation9], 4
      %s77 = int_to_ptr.vmem [resolvable:$true] %s76
      %82 = dma.hbm_to_vmem [thread:$0]  %s75, 512, %s77, [#allocation10], 128, 128, 8
    $region33: #{tpu_custom_call.1} parent=1 // pred_fallthru
      _
    // Predicated region
    $region34: #{tpu_custom_call.1} parent=1 // pred_check
      _
    $region35: #{tpu_custom_call.1} parent=1 // pred_check_branch
      %84 = sbr.rel (0) target = $region37
    $region36: #{tpu_custom_call.1} parent=1 // pred_region
      %86 = vsyncadd [#allocation10], 0
      %s87 = sshll.u32 %s8, 4
      %s88 = int_to_ptr.hbm [resolvable:$true] %s87
      %s89 = sshll.u32 [#allocation11], 4
      %s90 = int_to_ptr.vmem [resolvable:$true] %s89
      %95 = dma.hbm_to_vmem [thread:$0]  %s88, 512, %s90, [#allocation10], 128, 128, 8
    $region37: #{tpu_custom_call.1} parent=1 // pred_fallthru
      _
    // Predicated region
    $region38: #{tpu_custom_call.1} parent=1 // pred_check
      _
    $region39: #{tpu_custom_call.1} parent=1 // pred_check_branch
      %97 = sbr.rel (0) target = $region41
    $region40: #{tpu_custom_call.1} parent=1 // pred_region
      %99 = dma.done [#allocation4], 32
    $region41: #{tpu_custom_call.1} parent=1 // pred_fallthru
      _
    // Predicated region
    $region42: #{tpu_custom_call.1} parent=1 // pred_check
      _
    $region43: #{tpu_custom_call.1} parent=1 // pred_check_branch
      %101 = sbr.rel (0) target = $region45
    $region44: #{tpu_custom_call.1} parent=1 // pred_region
      %103 = dma.done [#allocation7], 32
    $region45: #{tpu_custom_call.1} parent=1 // pred_fallthru
      _
    // Predicated region
    $region46: #{tpu_custom_call.1} parent=1 // pred_check
      _
    $region47: #{tpu_custom_call.1} parent=1 // pred_check_branch
      %105 = sbr.rel (0) target = $region49
    $region48: #{tpu_custom_call.1} parent=1 // pred_region
      %107 = dma.done [#allocation7], 256
    $region49: #{tpu_custom_call.1} parent=1 // pred_fallthru
      _
    // Predicated region
    $region50: #{tpu_custom_call.1} parent=1 // pred_check
      _
    $region51: #{tpu_custom_call.1} parent=1 // pred_check_branch
      %109 = sbr.rel (0) target = $region53
    $region52: #{tpu_custom_call.1} parent=1 // pred_region
      %111 = dma.done [#allocation10], 512
    $region53: #{tpu_custom_call.1} parent=1 // pred_fallthru
      _
    // Predicated region
    $region54: #{tpu_custom_call.1} parent=1 // pred_check
      _
    $region55: #{tpu_custom_call.1} parent=1 // pred_check_branch
      %113 = sbr.rel (0) target = $region57
    $region56: #{tpu_custom_call.1} parent=1 // pred_region
      %115 = dma.done [#allocation10], 512
    $region57: #{tpu_custom_call.1} parent=1 // pred_fallthru
      _
    %p116 = scmp.eq.s32.totalorder 0, 0
    // Predicated region
    $region58: #{tpu_custom_call.1} parent=1 // pred_check
      %p117 = pneg %p116
    $region59: #{tpu_custom_call.1} parent=1 // pred_check_branch
      %119 = sbr.rel (%p117) target = $region61
    $region60: #{tpu_custom_call.1} parent=1 // pred_region
      %v120 = vld [vmem:[#allocation3] sm:$0x3]
      %vm121 = vcmask 254976
      %122 = vst.msk [vmem:[#allocation18] sm:$0x3] %vm121, %v120
      %v123 = vld [vmem:[#allocation6] sm:$0x3]
      %124 = vst.msk [vmem:[#allocation19] sm:$0x3] %vm121, %v123
    $region61: #{tpu_custom_call.1} parent=1 // pred_fallthru
      _
    %v125 = vld [vmem:[%s5] sm:$0xff]
    %v126 = vld [vmem:[%s5 + $0x8] sm:$0xff]
    %v127 = vld [vmem:[%s5 + $0x10] sm:$0xff]
    %v128 = vld [vmem:[%s5 + $0x18] sm:$0xff]
    %v129 = vld [vmem:[#allocation18] sm:$0x3]
    %v130 = vld [vmem:[#allocation19] sm:$0x3]
    %v131 = vld [vmem:[%s0] sm:$0x3]
    %vm132 = vcmask 261120
    %v134 = vsel %vm132, %v129, 0
    %136 = vmatpush.msra.mxu0 0.0
    %137 = vmatpush.msra.mxu0 0.0
    %138 = vmatpush.msra.mxu0 0.0
    %139 = vmatpush.msra.mxu0 0.0
    %140 = vmatpush.msra.mxu0 0.0
    %141 = vmatpush.msra.mxu0 0.0
    %142 = vmatpush.msra.mxu0 0.0
    %143 = vmatpush.msra.mxu0 0.0
    %144 = vmatpush.msra.mxu0 0.0
    %145 = vmatpush.msra.mxu0 0.0
    %146 = vmatpush.msra.mxu0 0.0
    %147 = vmatpush.msra.mxu0 0.0
    %148 = vmatpush.msra.mxu0 %v128
    %149 = vmatpush.msra.mxu0 %v127
    %150 = vmatpush.msra.mxu0 %v126
    %151 = vmatpush.msra.mxu0 %v125
    %152 = vmatmul.f32.gmra.mxu0 %v134
    %v153 = vpop.f32.mrf.mxu0
    %v154 = vadd.f32 0.0, %v153
    %155 = vdwg.mxu0
    %v156 = vadd.f32 %v131, %v154
    %v157 = vxor.u32 %v156, 2147483648
    %v158 = vmul.f32 %v157, 1.442695
    %v159 = vpow.pop %v158
    %v160 = vadd.f32 %v159, 1.0
    %v161 = vrcp.pop %v160
    %v162 = vmul.f32 %v160, %v161
    %v163 = vsub.f32 1.0, %v162
    %v164 = vmul.f32 %v161, %v163
    %v165 = vadd.f32 %v161, %v164
    %vm166 = vweird.f32 %v160
    %vm167 = vweird.f32 %v161
    %vm168 = vmor %vm166, %vm167
    %v169 = vsel %vm168, %v161, %v165
    %v170 = vand.u32 2147483647, %v160
    %vm171 = vcmp.eq.f32.partialorder %v170, 8.507059e+37
    %v172 = vand.u32 %v160, 2147483648
    %v173 = vor.u32 1.1754944e-38, %v172
    %v174 = vsel %vm171, %v173, %v169
    %v175 = vmul.f32 1.0, %v174
    %v176 = vtanh.pop %v156
    %178 = vrot.lane.b32.xlu0 %v130, 32
    %v179 = vpop.permute.xlu0 %178
    %v181 = vmul.f32 %v175, %v179
    %183 = vrot.lane.b32.xlu0 %v176, 64
    %v184 = vpop.permute.xlu0 %183
    %v186 = vmul.f32 %v175, %v184
    %188 = vrot.lane.b32.xlu0 %v186, 32
    %v189 = vpop.permute.xlu0 %188
    %v191 = vadd.f32 %v181, %v189
    %v192 = vtanh.pop %v191
    %194 = vrot.lane.b32.xlu0 %v192, 64
    %v195 = vpop.permute.xlu0 %194
    %v197 = vmul.f32 %v175, %v195
    %199 = vrot.lane.b32.xlu0 %v197, 32
    %v200 = vpop.permute.xlu0 %199
    %vm202 = vcmask 254976
    %203 = vst.msk [vmem:[#allocation2] sm:$0x3] %vm202, %v200
    %s204 = scalar_lea.vmem %s0, 2
    %v205 = vld [vmem:[%s204] sm:$0x3]
    %v206 = vsel %vm132, %v200, 0
    %208 = vmatpush.msra.mxu0 0.0
    %209 = vmatpush.msra.mxu0 0.0
    %210 = vmatpush.msra.mxu0 0.0
    %211 = vmatpush.msra.mxu0 0.0
    %212 = vmatpush.msra.mxu0 0.0
    %213 = vmatpush.msra.mxu0 0.0
    %214 = vmatpush.msra.mxu0 0.0
    %215 = vmatpush.msra.mxu0 0.0
    %216 = vmatpush.msra.mxu0 0.0
    %217 = vmatpush.msra.mxu0 0.0
    %218 = vmatpush.msra.mxu0 0.0
    %219 = vmatpush.msra.mxu0 0.0
    %220 = vmatpush.msra.mxu0 %v128
    %221 = vmatpush.msra.mxu0 %v127
    %222 = vmatpush.msra.mxu0 %v126
    %223 = vmatpush.msra.mxu0 %v125
    %224 = vmatmul.f32.gmra.mxu0 %v206
    %v225 = vpop.f32.mrf.mxu0
    %v226 = vadd.f32 0.0, %v225
    %227 = vdwg.mxu0
    %v228 = vadd.f32 %v205, %v226
    %v229 = vxor.u32 %v228, 2147483648
    %v230 = vmul.f32 %v229, 1.442695
    %v231 = vpow.pop %v230
    %v232 = vadd.f32 %v231, 1.0
    %v233 = vrcp.pop %v232
    %v234 = vmul.f32 %v232, %v233
    %v235 = vsub.f32 1.0, %v234
    %v236 = vmul.f32 %v233, %v235
    %v237 = vadd.f32 %v233, %v236
    %vm238 = vweird.f32 %v232
    %vm239 = vweird.f32 %v233
    %vm240 = vmor %vm238, %vm239
    %v241 = vsel %vm240, %v233, %v237
    %v242 = vand.u32 2147483647, %v232
    %vm243 = vcmp.eq.f32.partialorder %v242, 8.507059e+37
    %v244 = vand.u32 %v232, 2147483648
    %v245 = vor.u32 1.1754944e-38, %v244
    %v246 = vsel %vm243, %v245, %v241
    %v247 = vmul.f32 1.0, %v246
    %v248 = vtanh.pop %v228
    %v249 = vmul.f32 %v247, %v191
    %251 = vrot.lane.b32.xlu0 %v248, 64
    %v252 = vpop.permute.xlu0 %251
    %v254 = vmul.f32 %v247, %v252
    %256 = vrot.lane.b32.xlu0 %v254, 32
    %v257 = vpop.permute.xlu0 %256
    %v259 = vadd.f32 %v249, %v257
    %v260 = vtanh.pop %v259
    %262 = vrot.lane.b32.xlu0 %v260, 64
    %v263 = vpop.permute.xlu0 %262
    %v265 = vmul.f32 %v247, %v263
    %267 = vrot.lane.b32.xlu0 %v265, 32
    %v268 = vpop.permute.xlu0 %267
    %s270 = scalar_lea.vmem [#allocation2], 2
    %271 = vst.msk [vmem:[%s270] sm:$0x3] %vm202, %v268
    %s272 = scalar_lea.vmem %s0, 4
    %v273 = vld [vmem:[%s272] sm:$0x3]
    %v274 = vsel %vm132, %v268, 0
    %276 = vmatpush.msra.mxu0 0.0
    %277 = vmatpush.msra.mxu0 0.0
    %278 = vmatpush.msra.mxu0 0.0
    %279 = vmatpush.msra.mxu0 0.0
    %280 = vmatpush.msra.mxu0 0.0
    %281 = vmatpush.msra.mxu0 0.0
    %282 = vmatpush.msra.mxu0 0.0
    %283 = vmatpush.msra.mxu0 0.0
    %284 = vmatpush.msra.mxu0 0.0
    %285 = vmatpush.msra.mxu0 0.0
    %286 = vmatpush.msra.mxu0 0.0
    %287 = vmatpush.msra.mxu0 0.0
    %288 = vmatpush.msra.mxu0 %v128
    %289 = vmatpush.msra.mxu0 %v127
    %290 = vmatpush.msra.mxu0 %v126
    %291 = vmatpush.msra.mxu0 %v125
    %292 = vmatmul.f32.gmra.mxu0 %v274
    %v293 = vpop.f32.mrf.mxu0
    %v294 = vadd.f32 0.0, %v293
    %295 = vdwg.mxu0
    %v296 = vadd.f32 %v273, %v294
    %v297 = vxor.u32 %v296, 2147483648
    %v298 = vmul.f32 %v297, 1.442695
    %v299 = vpow.pop %v298
    %v300 = vadd.f32 %v299, 1.0
    %v301 = vrcp.pop %v300
    %v302 = vmul.f32 %v300, %v301
    %v303 = vsub.f32 1.0, %v302
    %v304 = vmul.f32 %v301, %v303
    %v305 = vadd.f32 %v301, %v304
    %vm306 = vweird.f32 %v300
    %vm307 = vweird.f32 %v301
    %vm308 = vmor %vm306, %vm307
    %v309 = vsel %vm308, %v301, %v305
    %v310 = vand.u32 2147483647, %v300
    %vm311 = vcmp.eq.f32.partialorder %v310, 8.507059e+37
    %v312 = vand.u32 %v300, 2147483648
    %v313 = vor.u32 1.1754944e-38, %v312
    %v314 = vsel %vm311, %v313, %v309
    %v315 = vmul.f32 1.0, %v314
    %v316 = vtanh.pop %v296
    %v317 = vmul.f32 %v315, %v259
    %319 = vrot.lane.b32.xlu0 %v316, 64
    %v320 = vpop.permute.xlu0 %319
    %v322 = vmul.f32 %v315, %v320
    %324 = vrot.lane.b32.xlu0 %v322, 32
    %v325 = vpop.permute.xlu0 %324
    %v327 = vadd.f32 %v317, %v325
    %v328 = vtanh.pop %v327
    %330 = vrot.lane.b32.xlu0 %v328, 64
    %v331 = vpop.permute.xlu0 %330
    %v333 = vmul.f32 %v315, %v331
    %335 = vrot.lane.b32.xlu0 %v333, 32
    %v336 = vpop.permute.xlu0 %335
    %s338 = scalar_lea.vmem [#allocation2], 4
    %339 = vst.msk [vmem:[%s338] sm:$0x3] %vm202, %v336
    %s340 = scalar_lea.vmem %s0, 6
    %v341 = vld [vmem:[%s340] sm:$0x3]
    %v342 = vsel %vm132, %v336, 0
    %344 = vmatpush.msra.mxu0 0.0
    %345 = vmatpush.msra.mxu0 0.0
    %346 = vmatpush.msra.mxu0 0.0
    %347 = vmatpush.msra.mxu0 0.0
    %348 = vmatpush.msra.mxu0 0.0
    %349 = vmatpush.msra.mxu0 0.0
    %350 = vmatpush.msra.mxu0 0.0
    %351 = vmatpush.msra.mxu0 0.0
    %352 = vmatpush.msra.mxu0 0.0
    %353 = vmatpush.msra.mxu0 0.0
    %354 = vmatpush.msra.mxu0 0.0
    %355 = vmatpush.msra.mxu0 0.0
    %356 = vmatpush.msra.mxu0 %v128
    %357 = vmatpush.msra.mxu0 %v127
    %358 = vmatpush.msra.mxu0 %v126
    %359 = vmatpush.msra.mxu0 %v125
    %360 = vmatmul.f32.gmra.mxu0 %v342
    %v361 = vpop.f32.mrf.mxu0
    %v362 = vadd.f32 0.0, %v361
    %363 = vdwg.mxu0
    %v364 = vadd.f32 %v341, %v362
    %v365 = vxor.u32 %v364, 2147483648
    %v366 = vmul.f32 %v365, 1.442695
    %v367 = vpow.pop %v366
    %v368 = vadd.f32 %v367, 1.0
    %v369 = vrcp.pop %v368
    %v370 = vmul.f32 %v368, %v369
    %v371 = vsub.f32 1.0, %v370
    %v372 = vmul.f32 %v369, %v371
    %v373 = vadd.f32 %v369, %v372
    %vm374 = vweird.f32 %v368
    %vm375 = vweird.f32 %v369
    %vm376 = vmor %vm374, %vm375
    %v377 = vsel %vm376, %v369, %v373
    %v378 = vand.u32 2147483647, %v368
    %vm379 = vcmp.eq.f32.partialorder %v378, 8.507059e+37
    %v380 = vand.u32 %v368, 2147483648
    %v381 = vor.u32 1.1754944e-38, %v380
    %v382 = vsel %vm379, %v381, %v377
    %v383 = vmul.f32 1.0, %v382
    %v384 = vtanh.pop %v364
    %v385 = vmul.f32 %v383, %v327
    %387 = vrot.lane.b32.xlu0 %v384, 64
    %v388 = vpop.permute.xlu0 %387
    %v390 = vmul.f32 %v383, %v388
    %392 = vrot.lane.b32.xlu0 %v390, 32
    %v393 = vpop.permute.xlu0 %392
    %v395 = vadd.f32 %v385, %v393
    %v396 = vtanh.pop %v395
    %398 = vrot.lane.b32.xlu0 %v396, 64
    %v399 = vpop.permute.xlu0 %398
    %v401 = vmul.f32 %v383, %v399
    %403 = vrot.lane.b32.xlu0 %v401, 32
    %v404 = vpop.permute.xlu0 %403
    %s406 = scalar_lea.vmem [#allocation2], 6
    %407 = vst.msk [vmem:[%s406] sm:$0x3] %vm202, %v404
    %s408 = scalar_lea.vmem %s0, 8
    %v409 = vld [vmem:[%s408] sm:$0x3]
    %v410 = vsel %vm132, %v404, 0
    %412 = vmatpush.msra.mxu0 0.0
    %413 = vmatpush.msra.mxu0 0.0
    %414 = vmatpush.msra.mxu0 0.0
    %415 = vmatpush.msra.mxu0 0.0
    %416 = vmatpush.msra.mxu0 0.0
    %417 = vmatpush.msra.mxu0 0.0
    %418 = vmatpush.msra.mxu0 0.0
    %419 = vmatpush.msra.mxu0 0.0
    %420 = vmatpush.msra.mxu0 0.0
    %421 = vmatpush.msra.mxu0 0.0
    %422 = vmatpush.msra.mxu0 0.0
    %423 = vmatpush.msra.mxu0 0.0
    %424 = vmatpush.msra.mxu0 %v128
    %425 = vmatpush.msra.mxu0 %v127
    %426 = vmatpush.msra.mxu0 %v126
    %427 = vmatpush.msra.mxu0 %v125
    %428 = vmatmul.f32.gmra.mxu0 %v410
    %v429 = vpop.f32.mrf.mxu0
    %v430 = vadd.f32 0.0, %v429
    %431 = vdwg.mxu0
    %v432 = vadd.f32 %v409, %v430
    %v433 = vxor.u32 %v432, 2147483648
    %v434 = vmul.f32 %v433, 1.442695
    %v435 = vpow.pop %v434
    %v436 = vadd.f32 %v435, 1.0
    %v437 = vrcp.pop %v436
    %v438 = vmul.f32 %v436, %v437
    %v439 = vsub.f32 1.0, %v438
    %v440 = vmul.f32 %v437, %v439
    %v441 = vadd.f32 %v437, %v440
    %vm442 = vweird.f32 %v436
    %vm443 = vweird.f32 %v437
    %vm444 = vmor %vm442, %vm443
    %v445 = vsel %vm444, %v437, %v441
    %v446 = vand.u32 2147483647, %v436
    %vm447 = vcmp.eq.f32.partialorder %v446, 8.507059e+37
    %v448 = vand.u32 %v436, 2147483648
    %v449 = vor.u32 1.1754944e-38, %v448
    %v450 = vsel %vm447, %v449, %v445
    %v451 = vmul.f32 1.0, %v450
    %v452 = vtanh.pop %v432
    %v453 = vmul.f32 %v451, %v395
    %455 = vrot.lane.b32.xlu0 %v452, 64
    %v456 = vpop.permute.xlu0 %455
    %v458 = vmul.f32 %v451, %v456
    %460 = vrot.lane.b32.xlu0 %v458, 32
    %v461 = vpop.permute.xlu0 %460
    %v463 = vadd.f32 %v453, %v461
    %v464 = vtanh.pop %v463
    %466 = vrot.lane.b32.xlu0 %v464, 64
    %v467 = vpop.permute.xlu0 %466
    %v469 = vmul.f32 %v451, %v467
    %471 = vrot.lane.b32.xlu0 %v469, 32
    %v472 = vpop.permute.xlu0 %471
    %s474 = scalar_lea.vmem [#allocation2], 8
    %475 = vst.msk [vmem:[%s474] sm:$0x3] %vm202, %v472
    %s476 = scalar_lea.vmem %s0, 10
    %v477 = vld [vmem:[%s476] sm:$0x3]
    %v478 = vsel %vm132, %v472, 0
    %480 = vmatpush.msra.mxu0 0.0
    %481 = vmatpush.msra.mxu0 0.0
    %482 = vmatpush.msra.mxu0 0.0
    %483 = vmatpush.msra.mxu0 0.0
    %484 = vmatpush.msra.mxu0 0.0
    %485 = vmatpush.msra.mxu0 0.0
    %486 = vmatpush.msra.mxu0 0.0
    %487 = vmatpush.msra.mxu0 0.0
    %488 = vmatpush.msra.mxu0 0.0
    %489 = vmatpush.msra.mxu0 0.0
    %490 = vmatpush.msra.mxu0 0.0
    %491 = vmatpush.msra.mxu0 0.0
    %492 = vmatpush.msra.mxu0 %v128
    %493 = vmatpush.msra.mxu0 %v127
    %494 = vmatpush.msra.mxu0 %v126
    %495 = vmatpush.msra.mxu0 %v125
    %496 = vmatmul.f32.gmra.mxu0 %v478
    %v497 = vpop.f32.mrf.mxu0
    %v498 = vadd.f32 0.0, %v497
    %499 = vdwg.mxu0
    %v500 = vadd.f32 %v477, %v498
    %v501 = vxor.u32 %v500, 2147483648
    %v502 = vmul.f32 %v501, 1.442695
    %v503 = vpow.pop %v502
    %v504 = vadd.f32 %v503, 1.0
    %v505 = vrcp.pop %v504
    %v506 = vmul.f32 %v504, %v505
    %v507 = vsub.f32 1.0, %v506
    %v508 = vmul.f32 %v505, %v507
    %v509 = vadd.f32 %v505, %v508
    %vm510 = vweird.f32 %v504
    %vm511 = vweird.f32 %v505
    %vm512 = vmor %vm510, %vm511
    %v513 = vsel %vm512, %v505, %v509
    %v514 = vand.u32 2147483647, %v504
    %vm515 = vcmp.eq.f32.partialorder %v514, 8.507059e+37
    %v516 = vand.u32 %v504, 2147483648
    %v517 = vor.u32 1.1754944e-38, %v516
    %v518 = vsel %vm515, %v517, %v513
    %v519 = vmul.f32 1.0, %v518
    %v520 = vtanh.pop %v500
    %v521 = vmul.f32 %v519, %v463
    %523 = vrot.lane.b32.xlu0 %v520, 64
    %v524 = vpop.permute.xlu0 %523
    %v526 = vmul.f32 %v519, %v524
    %528 = vrot.lane.b32.xlu0 %v526, 32
    %v529 = vpop.permute.xlu0 %528
    %v531 = vadd.f32 %v521, %v529
    %v532 = vtanh.pop %v531
    %534 = vrot.lane.b32.xlu0 %v532, 64
    %v535 = vpop.permute.xlu0 %534
    %v537 = vmul.f32 %v519, %v535
    %539 = vrot.lane.b32.xlu0 %v537, 32
    %v540 = vpop.permute.xlu0 %539
    %s542 = scalar_lea.vmem [#allocation2], 10
    %543 = vst.msk [vmem:[%s542] sm:$0x3] %vm202, %v540
    %s544 = scalar_lea.vmem %s0, 12
    %v545 = vld [vmem:[%s544] sm:$0x3]
    %v546 = vsel %vm132, %v540, 0
    %548 = vmatpush.msra.mxu0 0.0
    %549 = vmatpush.msra.mxu0 0.0
    %550 = vmatpush.msra.mxu0 0.0
    %551 = vmatpush.msra.mxu0 0.0
    %552 = vmatpush.msra.mxu0 0.0
    %553 = vmatpush.msra.mxu0 0.0
    %554 = vmatpush.msra.mxu0 0.0
    %555 = vmatpush.msra.mxu0 0.0
    %556 = vmatpush.msra.mxu0 0.0
    %557 = vmatpush.msra.mxu0 0.0
    %558 = vmatpush.msra.mxu0 0.0
    %559 = vmatpush.msra.mxu0 0.0
    %560 = vmatpush.msra.mxu0 %v128
    %561 = vmatpush.msra.mxu0 %v127
    %562 = vmatpush.msra.mxu0 %v126
    %563 = vmatpush.msra.mxu0 %v125
    %564 = vmatmul.f32.gmra.mxu0 %v546
    %v565 = vpop.f32.mrf.mxu0
    %v566 = vadd.f32 0.0, %v565
    %567 = vdwg.mxu0
    %v568 = vadd.f32 %v545, %v566
    %v569 = vxor.u32 %v568, 2147483648
    %v570 = vmul.f32 %v569, 1.442695
    %v571 = vpow.pop %v570
    %v572 = vadd.f32 %v571, 1.0
    %v573 = vrcp.pop %v572
    %v574 = vmul.f32 %v572, %v573
    %v575 = vsub.f32 1.0, %v574
    %v576 = vmul.f32 %v573, %v575
    %v577 = vadd.f32 %v573, %v576
    %vm578 = vweird.f32 %v572
    %vm579 = vweird.f32 %v573
    %vm580 = vmor %vm578, %vm579
    %v581 = vsel %vm580, %v573, %v577
    %v582 = vand.u32 2147483647, %v572
    %vm583 = vcmp.eq.f32.partialorder %v582, 8.507059e+37
    %v584 = vand.u32 %v572, 2147483648
    %v585 = vor.u32 1.1754944e-38, %v584
    %v586 = vsel %vm583, %v585, %v581
    %v587 = vmul.f32 1.0, %v586
    %v588 = vtanh.pop %v568
    %v589 = vmul.f32 %v587, %v531
    %591 = vrot.lane.b32.xlu0 %v588, 64
    %v592 = vpop.permute.xlu0 %591
    %v594 = vmul.f32 %v587, %v592
    %596 = vrot.lane.b32.xlu0 %v594, 32
    %v597 = vpop.permute.xlu0 %596
    %v599 = vadd.f32 %v589, %v597
    %v600 = vtanh.pop %v599
    %602 = vrot.lane.b32.xlu0 %v600, 64
    %v603 = vpop.permute.xlu0 %602
    %v605 = vmul.f32 %v587, %v603
    %607 = vrot.lane.b32.xlu0 %v605, 32
    %v608 = vpop.permute.xlu0 %607
    %s610 = scalar_lea.vmem [#allocation2], 12
    %611 = vst.msk [vmem:[%s610] sm:$0x3] %vm202, %v608
    %s612 = scalar_lea.vmem %s0, 14
    %v613 = vld [vmem:[%s612] sm:$0x3]
    %v614 = vsel %vm132, %v608, 0
    %616 = vmatpush.msra.mxu0 0.0
    %617 = vmatpush.msra.mxu0 0.0
    %618 = vmatpush.msra.mxu0 0.0
    %619 = vmatpush.msra.mxu0 0.0
    %620 = vmatpush.msra.mxu0 0.0
    %621 = vmatpush.msra.mxu0 0.0
    %622 = vmatpush.msra.mxu0 0.0
    %623 = vmatpush.msra.mxu0 0.0
    %624 = vmatpush.msra.mxu0 0.0
    %625 = vmatpush.msra.mxu0 0.0
    %626 = vmatpush.msra.mxu0 0.0
    %627 = vmatpush.msra.mxu0 0.0
    %628 = vmatpush.msra.mxu0 %v128
    %629 = vmatpush.msra.mxu0 %v127
    %630 = vmatpush.msra.mxu0 %v126
    %631 = vmatpush.msra.mxu0 %v125
    %632 = vmatmul.f32.gmra.mxu0 %v614
    %v633 = vpop.f32.mrf.mxu0
    %v634 = vadd.f32 0.0, %v633
    %635 = vdwg.mxu0
    %v636 = vadd.f32 %v613, %v634
    %v637 = vxor.u32 %v636, 2147483648
    %v638 = vmul.f32 %v637, 1.442695
    %v639 = vpow.pop %v638
    %v640 = vadd.f32 %v639, 1.0
    %v641 = vrcp.pop %v640
    %v642 = vmul.f32 %v640, %v641
    %v643 = vsub.f32 1.0, %v642
    %v644 = vmul.f32 %v641, %v643
    %v645 = vadd.f32 %v641, %v644
    %vm646 = vweird.f32 %v640
    %vm647 = vweird.f32 %v641
    %vm648 = vmor %vm646, %vm647
    %v649 = vsel %vm648, %v641, %v645
    %v650 = vand.u32 2147483647, %v640
    %vm651 = vcmp.eq.f32.partialorder %v650, 8.507059e+37
    %v652 = vand.u32 %v640, 2147483648
    %v653 = vor.u32 1.1754944e-38, %v652
    %v654 = vsel %vm651, %v653, %v649
    %v655 = vmul.f32 1.0, %v654
    %v656 = vtanh.pop %v636
    %v657 = vmul.f32 %v655, %v599
    %659 = vrot.lane.b32.xlu0 %v656, 64
    %v660 = vpop.permute.xlu0 %659
    %v662 = vmul.f32 %v655, %v660
    %664 = vrot.lane.b32.xlu0 %v662, 32
    %v665 = vpop.permute.xlu0 %664
    %v667 = vadd.f32 %v657, %v665
    %v668 = vtanh.pop %v667
    %670 = vrot.lane.b32.xlu0 %v668, 64
    %v671 = vpop.permute.xlu0 %670
    %v673 = vmul.f32 %v655, %v671
    %675 = vrot.lane.b32.xlu0 %v673, 32
    %v676 = vpop.permute.xlu0 %675
    %s678 = scalar_lea.vmem [#allocation2], 14
    %679 = vst.msk [vmem:[%s678] sm:$0x3] %vm202, %v676
    %680 = vst.msk [vmem:[#allocation18] sm:$0x3] %vm202, %v676
    %682 = vrot.lane.b32.xlu0 %v667, 96
    %v683 = vpop.permute.xlu0 %682
    %685 = vst.msk [vmem:[#allocation19] sm:$0x3] %vm202, %v683
    %v686 = vld [vmem:[#allocation2] sm:$0x3]
    %v687 = vld [vmem:[#allocation2 + $0x2] sm:$0x3]
    %v688 = vld [vmem:[#allocation2 + $0x4] sm:$0x3]
    %v689 = vld [vmem:[#allocation2 + $0x6] sm:$0x3]
    %v690 = vld [vmem:[#allocation2 + $0x8] sm:$0x3]
    %v691 = vld [vmem:[#allocation2 + $0xa] sm:$0x3]
    %v692 = vld [vmem:[#allocation2 + $0xc] sm:$0x3]
    %v693 = vld [vmem:[#allocation2 + $0xe] sm:$0x3]
    %v694 = vrot.slane %v688, 4
    %vm695 = vcmask 1047556
    %v696 = vsel %vm695, %v694, %v686
    %v698 = vunpack.c.l.s4 1983009808
    %v699 = vunpack.c.0.s8 %v698
    %v700 = vperm.slane %v696, %v699
    %v701 = vrot.slane %v689, 4
    %v702 = vsel %vm695, %v701, %v687
    %v704 = vunpack.c.l.s4 1983009808
    %v705 = vunpack.c.0.s8 %v704
    %v706 = vperm.slane %v702, %v705
    %v707 = vrot.slane %v692, 4
    %v708 = vsel %vm695, %v707, %v690
    %v710 = vunpack.c.l.s4 1983009808
    %v711 = vunpack.c.0.s8 %v710
    %v712 = vperm.slane %v708, %v711
    %v713 = vrot.slane %v693, 4
    %v714 = vsel %vm695, %v713, %v691
    %v716 = vunpack.c.l.s4 1983009808
    %v717 = vunpack.c.0.s8 %v716
    %v718 = vperm.slane %v714, %v717
    %v719 = vrot.slane %v706, 4
    %v720 = vsel %vm695, %v719, %v700
    %v722 = vunpack.c.l.s4 1934713408
    %v723 = vunpack.c.0.s8 %v722
    %v724 = vperm.slane %v720, %v723
    %v725 = vrot.slane %v718, 4
    %v726 = vsel %vm695, %v725, %v712
    %v728 = vunpack.c.l.s4 1934713408
    %v729 = vunpack.c.0.s8 %v728
    %v730 = vperm.slane %v726, %v729
    %v731 = vrot.slane %v730, 4
    %v732 = vsel %vm695, %v731, %v724
    %v733 = vrot.slane %v724, 4
    %v734 = vsel %vm695, %v730, %v733
    %735 = vst.msk [vmem:[#allocation12] sm:$0xff] %vm132, %v732
    %736 = vst.msk [vmem:[#allocation12 + $0x8] sm:$0xff] %vm132, %v734
    %v737 = vld [vmem:[%s6] sm:$0xff]
    %v738 = vld [vmem:[%s6 + $0x8] sm:$0xff]
    %v739 = vld [vmem:[%s6 + $0x10] sm:$0xff]
    %v740 = vld [vmem:[%s6 + $0x18] sm:$0xff]
    %v742 = vsel %vm132, %v732, 0
    %v745 = vsel %vm132, %v734, 0
    %747 = vmatpush.msra.mxu0 0.0
    %748 = vmatpush.msra.mxu0 0.0
    %749 = vmatpush.msra.mxu0 0.0
    %750 = vmatpush.msra.mxu0 0.0
    %751 = vmatpush.msra.mxu0 0.0
    %752 = vmatpush.msra.mxu0 0.0
    %753 = vmatpush.msra.mxu0 0.0
    %754 = vmatpush.msra.mxu0 0.0
    %755 = vmatpush.msra.mxu0 0.0
    %756 = vmatpush.msra.mxu0 0.0
    %757 = vmatpush.msra.mxu0 0.0
    %758 = vmatpush.msra.mxu0 0.0
    %759 = vmatpush.msra.mxu0 %v740
    %760 = vmatpush.msra.mxu0 %v739
    %761 = vmatpush.msra.mxu0 %v738
    %762 = vmatpush.msra.mxu0 %v737
    %763 = vmatmul.f32.gmra.mxu0 %v742
    %v764 = vpop.f32.mrf.mxu0
    %v765 = vadd.f32 0.0, %v764
    %766 = vmatmul.f32.gmra.mxu0 %v745
    %v767 = vpop.f32.mrf.mxu0
    %v768 = vadd.f32 0.0, %v767
    %769 = vdwg.mxu0
    %v770 = vld [vmem:[#allocation11] sm:$0xff]
    %v771 = vld [vmem:[#allocation11 + $0x8] sm:$0xff]
    %v772 = vld [vmem:[#allocation11 + $0x10] sm:$0xff]
    %v773 = vld [vmem:[#allocation11 + $0x18] sm:$0xff]
    %774 = vmatpush.msra.mxu0 0.0
    %775 = vmatpush.msra.mxu0 0.0
    %776 = vmatpush.msra.mxu0 0.0
    %777 = vmatpush.msra.mxu0 0.0
    %778 = vmatpush.msra.mxu0 0.0
    %779 = vmatpush.msra.mxu0 0.0
    %780 = vmatpush.msra.mxu0 0.0
    %781 = vmatpush.msra.mxu0 0.0
    %782 = vmatpush.msra.mxu0 0.0
    %783 = vmatpush.msra.mxu0 0.0
    %784 = vmatpush.msra.mxu0 0.0
    %785 = vmatpush.msra.mxu0 0.0
    %786 = vmatpush.msra.mxu0 %v773
    %787 = vmatpush.msra.mxu0 %v772
    %788 = vmatpush.msra.mxu0 %v771
    %789 = vmatpush.msra.mxu0 %v770
    %790 = vmatmul.f32.gmra.mxu0 %v742
    %v791 = vpop.f32.mrf.mxu0
    %v792 = vadd.f32 0.0, %v791
    %793 = vmatmul.f32.gmra.mxu0 %v745
    %v794 = vpop.f32.mrf.mxu0
    %v795 = vadd.f32 0.0, %v794
    %796 = vdwg.mxu0
    %v797 = vld [vmem:[%s4] sm:$0xff]
    %v798 = vld [vmem:[%s4 + $0x8] sm:$0xff]
    %v799 = vld [vmem:[%s4 + $0x10] sm:$0xff]
    %v800 = vld [vmem:[%s4 + $0x18] sm:$0xff]
    %v802 = vsel %vm132, %v765, 0
    %804 = vmatpush.msra.mxu0 0.0
    %805 = vmatpush.msra.mxu0 0.0
    %806 = vmatpush.msra.mxu0 0.0
    %807 = vmatpush.msra.mxu0 0.0
    %808 = vmatpush.msra.mxu0 0.0
    %809 = vmatpush.msra.mxu0 0.0
    %810 = vmatpush.msra.mxu0 0.0
    %811 = vmatpush.msra.mxu0 0.0
    %812 = vmatpush.msra.mxu0 0.0
    %813 = vmatpush.msra.mxu0 0.0
    %814 = vmatpush.msra.mxu0 0.0
    %815 = vmatpush.msra.mxu0 0.0
    %816 = vmatpush.msra.mxu0 %v800
    %817 = vmatpush.msra.mxu0 %v799
    %818 = vmatpush.msra.mxu0 %v798
    %819 = vmatpush.msra.mxu0 %v797
    %820 = vmatmul.f32.gmra.mxu0 %v802
    %v821 = vpop.f32.mrf.mxu0
    %v822 = vadd.f32 0.0, %v821
    %823 = vdwg.mxu0
    %s824 = scalar_lea.vmem %s4, 32
    %v825 = vld [vmem:[%s824] sm:$0xff]
    %v826 = vld [vmem:[%s824 + $0x8] sm:$0xff]
    %v827 = vld [vmem:[%s824 + $0x10] sm:$0xff]
    %v828 = vld [vmem:[%s824 + $0x18] sm:$0xff]
    %v830 = vsel %vm132, %v768, 0
    %832 = vmatpush.msra.mxu0 0.0
    %833 = vmatpush.msra.mxu0 0.0
    %834 = vmatpush.msra.mxu0 0.0
    %835 = vmatpush.msra.mxu0 0.0
    %836 = vmatpush.msra.mxu0 0.0
    %837 = vmatpush.msra.mxu0 0.0
    %838 = vmatpush.msra.mxu0 0.0
    %839 = vmatpush.msra.mxu0 0.0
    %840 = vmatpush.msra.mxu0 0.0
    %841 = vmatpush.msra.mxu0 0.0
    %842 = vmatpush.msra.mxu0 0.0
    %843 = vmatpush.msra.mxu0 0.0
    %844 = vmatpush.msra.mxu0 %v828
    %845 = vmatpush.msra.mxu0 %v827
    %846 = vmatpush.msra.mxu0 %v826
    %847 = vmatpush.msra.mxu0 %v825
    %848 = vmatmul.f32.gmra.mxu0 %v830
    %v849 = vpop.f32.mrf.mxu0
    %v850 = vadd.f32 0.0, %v849
    %851 = vdwg.mxu0
    %vm852 = vcmask 64512
    %v853 = vsel %vm852, %v822, -inf
    %854 = vmax.xlane.f32.xlu0 %v853
    %v855 = vpop.xlane.xlu0 %854
    %v856 = vsel %vm852, %v850, -inf
    %857 = vmax.xlane.f32.xlu0 %v856
    %v858 = vpop.xlane.xlu0 %857
    %v859 = vsub.f32 %v822, %v855
    %v860 = vsub.f32 %v850, %v858
    %v861 = vmul.f32 %v859, 1.442695
    %v862 = vpow.pop %v861
    %v863 = vmul.f32 %v860, 1.442695
    %v864 = vpow.pop %v863
    %v865 = vsel %vm852, %v862, 0.0
    %866 = vadd.xlane.f32.xlu0 %v865
    %v867 = vpop.xlane.xlu0 %866
    %v868 = vsel %vm852, %v864, 0.0
    %869 = vadd.xlane.f32.xlu0 %v868
    %v870 = vpop.xlane.xlu0 %869
    %v871 = vrcp.pop %v867
    %v872 = vrcp.pop %v870
    %v873 = vmul.f32 %v862, %v871
    %v874 = vmul.f32 %v864, %v872
    %v875 = vld [vmem:[#allocation8] sm:$0xff]
    %v877 = vsel %vm852, %v873, 0
    %879 = vmatpush.msra.mxu0 0.0
    %880 = vmatpush.msra.mxu0 0.0
    %881 = vmatpush.msra.mxu0 0.0
    %882 = vmatpush.msra.mxu0 0.0
    %883 = vmatpush.msra.mxu0 0.0
    %884 = vmatpush.msra.mxu0 0.0
    %885 = vmatpush.msra.mxu0 0.0
    %886 = vmatpush.msra.mxu0 0.0
    %887 = vmatpush.msra.mxu0 0.0
    %888 = vmatpush.msra.mxu0 0.0
    %889 = vmatpush.msra.mxu0 0.0
    %890 = vmatpush.msra.mxu0 0.0
    %891 = vmatpush.msra.mxu0 0.0
    %892 = vmatpush.msra.mxu0 0.0
    %893 = vmatpush.msra.mxu0 0.0
    %894 = vmatpush.msra.mxu0 %v875
    %895 = vmatmul.f32.gmra.mxu0 %v877
    %v896 = vpop.f32.mrf.mxu0
    %v897 = vadd.f32 0.0, %v896
    %898 = vdwg.mxu0
    %s899 = scalar_lea.vmem [#allocation8], 8
    %v900 = vld [vmem:[%s899] sm:$0xff]
    %v902 = vsel %vm852, %v874, 0
    %904 = vmatpush.msra.mxu0 0.0
    %905 = vmatpush.msra.mxu0 0.0
    %906 = vmatpush.msra.mxu0 0.0
    %907 = vmatpush.msra.mxu0 0.0
    %908 = vmatpush.msra.mxu0 0.0
    %909 = vmatpush.msra.mxu0 0.0
    %910 = vmatpush.msra.mxu0 0.0
    %911 = vmatpush.msra.mxu0 0.0
    %912 = vmatpush.msra.mxu0 0.0
    %913 = vmatpush.msra.mxu0 0.0
    %914 = vmatpush.msra.mxu0 0.0
    %915 = vmatpush.msra.mxu0 0.0
    %916 = vmatpush.msra.mxu0 0.0
    %917 = vmatpush.msra.mxu0 0.0
    %918 = vmatpush.msra.mxu0 0.0
    %919 = vmatpush.msra.mxu0 %v900
    %920 = vmatmul.f32.gmra.mxu0 %v902
    %v921 = vpop.f32.mrf.mxu0
    %v922 = vadd.f32 0.0, %v921
    %923 = vdwg.mxu0
    %v924 = vld [vmem:[#allocation9] sm:$0xff]
    %v925 = vld [vmem:[#allocation9 + $0x8] sm:$0xff]
    %v926 = vld [vmem:[#allocation9 + $0x10] sm:$0xff]
    %v927 = vld [vmem:[#allocation9 + $0x18] sm:$0xff]
    %v929 = vsel %vm132, %v897, 0
    %v932 = vsel %vm132, %v922, 0
    %934 = vmatpush.msra.mxu0 0.0
    %935 = vmatpush.msra.mxu0 0.0
    %936 = vmatpush.msra.mxu0 0.0
    %937 = vmatpush.msra.mxu0 0.0
    %938 = vmatpush.msra.mxu0 0.0
    %939 = vmatpush.msra.mxu0 0.0
    %940 = vmatpush.msra.mxu0 0.0
    %941 = vmatpush.msra.mxu0 0.0
    %942 = vmatpush.msra.mxu0 0.0
    %943 = vmatpush.msra.mxu0 0.0
    %944 = vmatpush.msra.mxu0 0.0
    %945 = vmatpush.msra.mxu0 0.0
    %946 = vmatpush.msra.mxu0 %v927
    %947 = vmatpush.msra.mxu0 %v926
    %948 = vmatpush.msra.mxu0 %v925
    %949 = vmatpush.msra.mxu0 %v924
    %950 = vmatmul.f32.gmra.mxu0 %v929
    %v951 = vpop.f32.mrf.mxu0
    %v952 = vadd.f32 %v792, %v951
    %953 = vmatmul.f32.gmra.mxu0 %v932
    %v954 = vpop.f32.mrf.mxu0
    %v955 = vadd.f32 %v795, %v954
    %956 = vdwg.mxu0
    %v957 = vtanh.pop %v952
    %v958 = vtanh.pop %v955
    %959 = vst.msk [vmem:[#allocation13] sm:$0xff] %vm132, %v957
    %960 = vst.msk [vmem:[#allocation13 + $0x8] sm:$0xff] %vm132, %v958
    %961 = vst.msk [vmem:[#allocation15] sm:$0xff] %vm132, %v897
    %962 = vst.msk [vmem:[#allocation15 + $0x8] sm:$0xff] %vm132, %v922
    %963 = vst.msk [vmem:[#allocation16] sm:$0xff] %vm852, %v873
    %964 = vst.msk [vmem:[#allocation16 + $0x8] sm:$0xff] %vm852, %v874
    // Predicated region
    $region62: #{tpu_custom_call.1} parent=1 // pred_check
      _
    $region63: #{tpu_custom_call.1} parent=1 // pred_check_branch
      %966 = sbr.rel (0) target = $region65
    $region64: #{tpu_custom_call.1} parent=1 // pred_region
      %968 = vsyncadd [#allocation5], 0
      %s969 = sshll.u32 [#allocation12], 4
      %s970 = int_to_ptr.vmem [resolvable:$true] %s969
      %s971 = sshll.u32 %s9, 4
      %s972 = int_to_ptr.hbm [resolvable:$true] %s971
      %977 = dma.vmem_to_hbm [thread:$0]  %s970, 256, %s972, [#allocation5], 128, 128, 8
    $region65: #{tpu_custom_call.1} parent=1 // pred_fallthru
      _
    // Predicated region
    $region66: #{tpu_custom_call.1} parent=1 // pred_check
      _
    $region67: #{tpu_custom_call.1} parent=1 // pred_check_branch
      %979 = sbr.rel (0) target = $region69
    $region68: #{tpu_custom_call.1} parent=1 // pred_region
      %981 = vsyncadd [#allocation14], 0
      %s982 = sshll.u32 [#allocation13], 4
      %s983 = int_to_ptr.vmem [resolvable:$true] %s982
      %s984 = sshll.u32 %s10, 4
      %s985 = int_to_ptr.hbm [resolvable:$true] %s984
      %990 = dma.vmem_to_hbm [thread:$0]  %s983, 256, %s985, [#allocation14], 128, 128, 8
    $region69: #{tpu_custom_call.1} parent=1 // pred_fallthru
      _
    // Predicated region
    $region70: #{tpu_custom_call.1} parent=1 // pred_check
      _
    $region71: #{tpu_custom_call.1} parent=1 // pred_check_branch
      %992 = sbr.rel (0) target = $region73
    $region72: #{tpu_custom_call.1} parent=1 // pred_region
      %994 = vsyncadd [#allocation14], 0
      %s995 = sshll.u32 [#allocation15], 4
      %s996 = int_to_ptr.vmem [resolvable:$true] %s995
      %s997 = sshll.u32 %s11, 4
      %s998 = int_to_ptr.hbm [resolvable:$true] %s997
      %1003 = dma.vmem_to_hbm [thread:$0]  %s996, 256, %s998, [#allocation14], 128, 128, 8
    $region73: #{tpu_custom_call.1} parent=1 // pred_fallthru
      _
    // Predicated region
    $region74: #{tpu_custom_call.1} parent=1 // pred_check
      _
    $region75: #{tpu_custom_call.1} parent=1 // pred_check_branch
      %1005 = sbr.rel (0) target = $region77
    $region76: #{tpu_custom_call.1} parent=1 // pred_region
      %1007 = vsyncadd [#allocation17], 0
      %s1008 = sshll.u32 [#allocation16], 4
      %s1009 = int_to_ptr.vmem [resolvable:$true] %s1008
      %s1010 = sshll.u32 %s12, 4
      %s1011 = int_to_ptr.hbm [resolvable:$true] %s1010
      %1016 = dma.vmem_to_hbm [thread:$0]  %s1009, 256, %s1011, [#allocation17], 128, 128, 8
    $region77: #{tpu_custom_call.1} parent=1 // pred_fallthru
      _
    // Predicated region
    $region78: #{tpu_custom_call.1} parent=1 // pred_check
      _
    $region79: #{tpu_custom_call.1} parent=1 // pred_check_branch
      %1018 = sbr.rel (0) target = $region81
    $region80: #{tpu_custom_call.1} parent=1 // pred_region
      %1020 = vsyncadd [#allocation17], 0
      %s1022 = sshll.u32 [#allocation18], 4
      %s1023 = int_to_ptr.vmem [resolvable:$true] %s1022
      %s1024 = sshll.u32 %s13, 4
      %s1025 = int_to_ptr.hbm [resolvable:$true] %s1024
      %1027 = dma.vmem_to_hbm [thread:$0]  %s1023, 32, %s1025, [#allocation17]
    $region81: #{tpu_custom_call.1} parent=1 // pred_fallthru
      _
    // Predicated region
    $region82: #{tpu_custom_call.1} parent=1 // pred_check
      _
    $region83: #{tpu_custom_call.1} parent=1 // pred_check_branch
      %1029 = sbr.rel (0) target = $region85
    $region84: #{tpu_custom_call.1} parent=1 // pred_region
      %1031 = vsyncadd [#allocation20], 0
      %s1033 = sshll.u32 [#allocation19], 4
      %s1034 = int_to_ptr.vmem [resolvable:$true] %s1033
      %s1035 = sshll.u32 %s14, 4
      %s1036 = int_to_ptr.hbm [resolvable:$true] %s1035
      %1038 = dma.vmem_to_hbm [thread:$0]  %s1034, 32, %s1036, [#allocation20]
    $region85: #{tpu_custom_call.1} parent=1 // pred_fallthru
      _
    // Predicated region
    $region86: #{tpu_custom_call.1} parent=1 // pred_check
      _
    $region87: #{tpu_custom_call.1} parent=1 // pred_check_branch
      %1040 = sbr.rel (0) target = $region89
    $region88: #{tpu_custom_call.1} parent=1 // pred_region
      %1042 = dma.done [#allocation5], 256
    $region89: #{tpu_custom_call.1} parent=1 // pred_fallthru
      _
    // Predicated region
    $region90: #{tpu_custom_call.1} parent=1 // pred_check
      _
    $region91: #{tpu_custom_call.1} parent=1 // pred_check_branch
      %1044 = sbr.rel (0) target = $region93
    $region92: #{tpu_custom_call.1} parent=1 // pred_region
      %1046 = dma.done [#allocation14], 256
    $region93: #{tpu_custom_call.1} parent=1 // pred_fallthru
      _
    // Predicated region
    $region94: #{tpu_custom_call.1} parent=1 // pred_check
      _
    $region95: #{tpu_custom_call.1} parent=1 // pred_check_branch
      %1048 = sbr.rel (0) target = $region97
    $region96: #{tpu_custom_call.1} parent=1 // pred_region
      %1050 = dma.done [#allocation14], 256
    $region97: #{tpu_custom_call.1} parent=1 // pred_fallthru
      _
    // Predicated region
    $region98: #{tpu_custom_call.1} parent=1 // pred_check
      _
    $region99: #{tpu_custom_call.1} parent=1 // pred_check_branch
      %1052 = sbr.rel (0) target = $region101
    $region100: #{tpu_custom_call.1} parent=1 // pred_region
      %1054 = dma.done [#allocation17], 256
    $region101: #{tpu_custom_call.1} parent=1 // pred_fallthru
      _
    // Predicated region
    $region102: #{tpu_custom_call.1} parent=1 // pred_check
      _
    $region103: #{tpu_custom_call.1} parent=1 // pred_check_branch
      %1056 = sbr.rel (0) target = $region105
    $region104: #{tpu_custom_call.1} parent=1 // pred_region
      %1058 = dma.done [#allocation17], 32
    $region105: #{tpu_custom_call.1} parent=1 // pred_fallthru
      _
    // Predicated region
    $region106: #{tpu_custom_call.1} parent=1 // pred_check
      _
    $region107: #{tpu_custom_call.1} parent=1 // pred_check_branch
      %1060 = sbr.rel (0) target = $region109
    $region108: #{tpu_custom_call.1} parent=1 // pred_region
      %1062 = dma.done [#allocation20], 32
    $region109: #{tpu_custom_call.1} parent=1 // pred_fallthru
      _
    %1063 = vsyncpa [#allocation4], 1
    %1064 = vsyncpa [#allocation7], 1
    %1065 = vsyncpa [#allocation10], 1
    %1066 = vsyncpa [#allocation5], 1
    %1067 = vsyncpa [#allocation14], 1
    %1068 = vsyncpa [#allocation17], 1
    %1069 = vsyncpa [#allocation20], 1

</llo_original>
